<compile_context>
chip_gen: v6e
topology: v6e:2x2x1
jax: 0.10.0
libtpu: 0.0.40
codegen_flags: <defaults>
</compile_context>

<pallas_src>
import math

import jax
import jax.numpy as jnp
import numpy as np
from jax.experimental import pallas as pl
from jax.experimental.pallas import tpu as pltpu

# ----------------------------- configuration --------------------------------
N_AGENTS = 4          # args.n_agents
HID = 32              # args.rnn_hidden_dim
N_ATT = 8             # args.n_attention
N_ACTIONS = 6         # args.n_actions
IN_DIM = 16           # input_shape
TAU = 1.0             # args.gumbel_softmax_tau
GROUPS = 2            # bz // n_agents
BZ = GROUPS * N_AGENTS
S = N_AGENTS - 1      # pair-sequence length
SQRT_ATT = math.sqrt(N_ATT)

# select_ind from the PyTorch code: row i lists all j != i
_SELECT_IND_NP = np.array(
    [[j for j in range(N_AGENTS) if j != i] for i in range(N_AGENTS)],
    dtype=np.int32)
SELECT_IND = jnp.asarray(_SELECT_IND_NP)

# One-hot row-selection matrix implementing the neighbour gather inside the
# kernel as a tiny matmul. Rows are time-major: row t*BZ + (g*N + i) selects
# h_rnn row g*N + SELECT_IND[i, t]. (Exact: 0/1 entries pick bf16-rounded rows
# which is exactly what the downstream bf16 matmul would see anyway.)
_onehot = np.zeros((S, BZ, BZ), dtype=np.float32)
for _t in range(S):
    for _g in range(GROUPS):
        for _i in range(N_AGENTS):
            _onehot[_t, _g * N_AGENTS + _i,
                    _g * N_AGENTS + _SELECT_IND_NP[_i, _t]] = 1.0
SEL_ONEHOT = jnp.asarray(_onehot.reshape(S * BZ, BZ))


# ------------------------------ shared math ----------------------------------
def mm(a, b):
    """MXU matmul: bf16 operands (native on v5e/v6e/v7x), f32 accumulation."""
    return jnp.dot(a.astype(jnp.bfloat16), b.astype(jnp.bfloat16),
                   preferred_element_type=jnp.float32)


def gru_gates(xg, h, whh, bhh):
    """PyTorch GRU step given the precomputed input projection.

    xg : (B, 3H) = x @ W_ih + b_ih   (gate order r|z|n, bias already added)
    h  : (B, H)  previous hidden state (f32)
    whh: (H, 3H) hidden weights (gate-concatenated); bhh: (1|B, 3H) bias.
    Element-wise math stays in f32 (v5e has no bf16 VPU/EUP path).
    """
    hg = mm(h, whh) + bhh
    r = jax.nn.sigmoid(xg[:, 0:HID] + hg[:, 0:HID])
    z = jax.nn.sigmoid(xg[:, HID:2 * HID] + hg[:, HID:2 * HID])
    n = jnp.tanh(xg[:, 2 * HID:3 * HID] + r * hg[:, 2 * HID:3 * HID])
    return (1.0 - z) * n + z * h


# ------------------------------- fused kernel ---------------------------------
def g2a_fused_kernel(x_ref, h0_ref, g_ref, sel_ref,
                     w1_ref, b1_ref,
                     wih_ref, whh_ref, bih_ref, bhh_ref,
                     wif_ref, whf_ref, bif_ref, bhf_ref,
                     wib_ref, whb_ref, bib_ref, bhb_ref,
                     whc_ref, bhc_ref, wq_ref, wk_ref, w2_ref, b2_ref,
                     q_ref, hout_ref):
    # ---- fc1 + ReLU, then GRUCell (gate-concatenated weights: 2 matmuls) ----
    x = jnp.maximum(mm(x_ref[...], w1_ref[...]) + b1_ref[...], 0.0)
    xg0 = mm(x, wih_ref[...]) + bih_ref[...]
    h_rnn = gru_gates(xg0, h0_ref[...], whh_ref[...], bhh_ref[...])
    hout_ref[...] = h_rnn

    # ---- agent-pair sequence, time-major (S*BZ, 2H), kept in VMEM/vregs -----
    h_i = jnp.concatenate([h_rnn] * S, axis=0)              # "self" rows
    h_j = mm(sel_ref[...], h_rnn)                           # neighbour rows
    seq = jnp.concatenate([h_i, h_j], axis=-1)              # (S*BZ, 2H)

    # ---- bidirectional GRU: input projection hoisted out of the recurrence --
    xg_f = mm(seq, wif_ref[...]) + bif_ref[...]              # (S*BZ, 3H)
    xg_b = mm(seq, wib_ref[...]) + bib_ref[...]              # (S*BZ, 3H)

    whf = whf_ref[...].astype(jnp.bfloat16)                  # hoisted casts
    whb = whb_ref[...].astype(jnp.bfloat16)
    bhf = jnp.broadcast_to(bhf_ref[...], (BZ, 3 * HID))      # hoisted broadcasts
    bhb = jnp.broadcast_to(bhb_ref[...], (BZ, 3 * HID))

    hf = jnp.zeros((BZ, HID), jnp.float32)
    outs_f = []
    for t in range(S):                                       # forward direction
        hf = gru_gates(xg_f[t * BZ:(t + 1) * BZ, :], hf, whf, bhf)
        outs_f.append(hf)
    hb = jnp.zeros((BZ, HID), jnp.float32)
    outs_b = [None] * S
    for t in range(S - 1, -1, -1):                           # backward direction
        hb = gru_gates(xg_b[t * BZ:(t + 1) * BZ, :], hb, whb, bhb)
        outs_b[t] = hb

    # ---- hard classifier + gumbel softmax (noise supplied as an input) ------
    h_hard = jnp.concatenate(
        [jnp.concatenate([outs_f[t], outs_b[t]], axis=-1) for t in range(S)],
        axis=0)                                              # (S*BZ, 2H) t-major
    logits = mm(h_hard, whc_ref[...]) + bhc_ref[...]         # (S*BZ, 2)
    y = (logits + g_ref[...]) * (1.0 / TAU)
    y = y - jnp.max(y, axis=-1, keepdims=True)
    e = jnp.exp(y)
    probs = e / jnp.sum(e, axis=-1, keepdims=True)
    hw_col = probs[:, 1:2]                                   # (S*BZ, 1)
    hw = [hw_col[t * BZ:(t + 1) * BZ, :] for t in range(S)]  # S x (BZ, 1)

    # ---- hard-gated attention + fc2 ------------------------------------------
    # NOTE: the torch gathers pick k_j == k_i and x_j == h_i (the gathered
    # tensors are constant along the neighbour axis), so attention reduces to
    # a scalar re-weighting of the agent's own state; reproduced faithfully.
    q = mm(h_rnn, wq_ref[...])                               # (BZ, A)
    k = mm(h_rnn, wk_ref[...])                               # (BZ, A)
    qk = jnp.sum(q * k, axis=-1, keepdims=True) * (1.0 / SQRT_ATT)   # (BZ, 1)
    raw = [hw[t] * qk for t in range(S)]                     # attention logits
    m = raw[0]
    for t in range(1, S):
        m = jnp.maximum(m, raw[t])
    e_att = [jnp.exp(raw[t] - m) for t in range(S)]
    denom = e_att[0]
    for t in range(1, S):
        denom = denom + e_att[t]
    wsum = hw[0] * e_att[0]
    for t in range(1, S):
        wsum = wsum + hw[t] * e_att[t]
    wsum = wsum / denom                                      # sum_s hard_s*soft_s
    x_att = wsum * h_rnn                                     # weighted neighbour sum
    xcat = jnp.concatenate([h_rnn, x_att], axis=-1)          # (BZ, 2H)
    q_ref[...] = mm(xcat, w2_ref[...]) + b2_ref[...]         # single fused fc2


# --------------------------------- wrapper ------------------------------------
_VMEM = pl.BlockSpec(memory_space=pltpu.MemorySpace.VMEM)


def g2a_forward_pallas(inputs, hidden_state, p, gumbel_tm):
    """gumbel_tm: (S*BZ, 2) Gumbel noise, time-major rows (t*BZ + b)."""
    args = (inputs, hidden_state.reshape(-1, HID), gumbel_tm, SEL_ONEHOT,
            p["w1"], p["b1"],
            p["wih"], p["whh"], p["bih"], p["bhh"],
            p["wif"], p["whf"], p["bif"], p["bhf"],
            p["wib"], p["whb"], p["bib"], p["bhb"],
            p["w_hc"], p["b_hc"], p["wq"], p["wk"], p["w2"], p["b2"])
    # TODO(synk): for production batch sizes add a batch grid axis with
    # dimension_semantics=("parallel",) so v7x's second TensorCore is used.
    return pl.pallas_call(
        g2a_fused_kernel,
        out_shape=(jax.ShapeDtypeStruct((BZ, N_ACTIONS), jnp.float32),
                   jax.ShapeDtypeStruct((BZ, HID), jnp.float32)),
        in_specs=[_VMEM] * len(args),
        out_specs=(_VMEM, _VMEM),
    )(*args)


# -------------------- pure-JAX reference (mirrors the torch code) -------------
def g2a_forward_ref(inputs, hidden_state, p, gumbel_bm):
    """Pure-JAX mirror of the PyTorch module (gumbel_bm rows are b*S + t)."""
    x = jnp.maximum(mm(inputs, p["w1"]) + p["b1"], 0.0)
    h_in = hidden_state.reshape(-1, HID)
    h_rnn = gru_gates(mm(x, p["wih"]) + p["bih"], h_in, p["whh"], p["bhh"])

    ii = jnp.arange(N_AGENTS)[:, None]
    hg = h_rnn.reshape(GROUPS, N_AGENTS, HID)
    rep = jnp.broadcast_to(hg[:, :, None, :], (GROUPS, N_AGENTS, N_AGENTS, HID))
    rep_t = jnp.swapaxes(rep, 1, 2)
    cat = jnp.concatenate([rep, rep_t], axis=-1)
    gathered = cat[:, ii, SELECT_IND, :]                     # (G, N, S, 2H)
    seq = jnp.transpose(gathered, (2, 0, 1, 3)).reshape(S, BZ, 2 * HID)

    hf = jnp.zeros((BZ, HID), jnp.float32)
    outs_f = []
    for t in range(S):
        hf = gru_gates(mm(seq[t], p["wif"]) + p["bif"], hf, p["whf"], p["bhf"])
        outs_f.append(hf)
    hb = jnp.zeros((BZ, HID), jnp.float32)
    outs_b = [None] * S
    for t in range(S - 1, -1, -1):
        hb = gru_gates(mm(seq[t], p["wib"]) + p["bib"], hb, p["whb"], p["bhb"])
        outs_b[t] = hb
    h_hard = jnp.stack(
        [jnp.concatenate([outs_f[t], outs_b[t]], -1) for t in range(S)], 0)
    h_hard = jnp.transpose(h_hard, (1, 0, 2)).reshape(BZ * S, 2 * HID)

    logits = mm(h_hard, p["w_hc"]) + p["b_hc"]
    hw = jax.nn.softmax((logits + gumbel_bm) / TAU, axis=-1)
    hw4 = hw[:, 1].reshape(GROUPS, N_AGENTS, S, 1)

    q = mm(h_rnn, p["wq"]).reshape(GROUPS, N_AGENTS, 1, N_ATT)
    k = mm(h_rnn, p["wk"]).reshape(GROUPS, N_AGENTS, 1, N_ATT)
    k = jnp.broadcast_to(k, (GROUPS, N_AGENTS, N_AGENTS, N_ATT))
    k = k[:, ii, SELECT_IND, :]
    k = hw4 * k
    k = jnp.swapaxes(k, 2, 3)
    raw = jnp.matmul(q, k, precision=jax.lax.Precision.HIGHEST) / SQRT_ATT
    soft = jax.nn.softmax(raw, axis=-1).reshape(GROUPS, N_AGENTS, S, 1)

    xg = jnp.broadcast_to(hg[:, :, None, :], (GROUPS, N_AGENTS, N_AGENTS, HID))
    xg = xg[:, ii, SELECT_IND, :]
    w = (hw4 * soft).reshape(GROUPS, N_AGENTS, 1, S)
    x_att = jnp.matmul(w, xg, precision=jax.lax.Precision.HIGHEST)
    xcat = jnp.concatenate([h_rnn, x_att.reshape(BZ, HID)], axis=-1)
    q_out = mm(xcat, p["w2"]) + p["b2"]
    return q_out, h_rnn


# ------------------------------ parameters ------------------------------------
def init_params(key):
    ks = jax.random.split(key, 20)
    n = lambda k, s: (0.1 * jax.random.normal(k, s)).astype(jnp.float32)
    p = {}
    p["w1"] = n(ks[0], (IN_DIM, HID));         p["b1"] = n(ks[1], (1, HID))
    # GRUCell: gate-concatenated (r|z|n) weights, x @ W layout.
    p["wih"] = n(ks[2], (HID, 3 * HID));       p["whh"] = n(ks[3], (HID, 3 * HID))
    p["bih"] = n(ks[4], (1, 3 * HID));         p["bhh"] = n(ks[5], (1, 3 * HID))
    # bidirectional GRU (forward / backward directions), gate-concatenated.
    p["wif"] = n(ks[6], (2 * HID, 3 * HID));   p["whf"] = n(ks[7], (HID, 3 * HID))
    p["bif"] = n(ks[8], (1, 3 * HID));         p["bhf"] = n(ks[9], (1, 3 * HID))
    p["wib"] = n(ks[10], (2 * HID, 3 * HID));  p["whb"] = n(ks[11], (HID, 3 * HID))
    p["bib"] = n(ks[12], (1, 3 * HID));        p["bhb"] = n(ks[13], (1, 3 * HID))
    p["w_hc"] = n(ks[14], (2 * HID, 2));       p["b_hc"] = n(ks[15], (1, 2))
    p["wq"] = n(ks[16], (HID, N_ATT));         p["wk"] = n(ks[17], (HID, N_ATT))
    p["w2"] = n(ks[18], (2 * HID, N_ACTIONS)); p["b2"] = n(ks[19], (1, N_ACTIONS))
    return p


if __name__ == "__main__":
    key = jax.random.PRNGKey(0)
    k_par, k_in, k_hid, k_gum = jax.random.split(key, 4)

    params = init_params(k_par)
    inputs = (0.5 * jax.random.normal(k_in, (BZ, IN_DIM))).astype(jnp.float32)
    hidden = (0.1 * jax.random.normal(k_hid, (BZ, HID))).astype(jnp.float32)
    # Gumbel noise for F.gumbel_softmax (torch RNG has no JAX equivalent); the
    # kernel consumes it time-major, the reference batch-major.
    gumbel_tm = jax.random.gumbel(k_gum, (S, BZ, 2)).astype(jnp.float32)

    q_out, h_rnn = g2a_forward_pallas(inputs, hidden, params,
                                      gumbel_tm.reshape(S * BZ, 2))
    q_out = jax.block_until_ready(q_out)
    h_rnn = jax.block_until_ready(h_rnn)

    gumbel_bm = jnp.transpose(gumbel_tm, (1, 0, 2)).reshape(BZ * S, 2)
    q_ref, h_ref = g2a_forward_ref(inputs, hidden, params, gumbel_bm)

    assert q_out.shape == (BZ, N_ACTIONS) and h_rnn.shape == (BZ, HID)
    np.testing.assert_allclose(np.asarray(h_rnn), np.asarray(h_ref),
                               rtol=1e-3, atol=1e-3)
    np.testing.assert_allclose(np.asarray(q_out), np.asarray(q_ref),
                               rtol=1e-3, atol=1e-3)
    print("KERNEL_OK")
</pallas_src>

<mosaic_0001>
module attributes {stable_mosaic.version = 11 : i64} {
  func.func @g2a_fused_kernel(%arg0: memref<8x16xf32, #tpu.memory_space<vmem>>, %arg1: memref<8x32xf32, #tpu.memory_space<vmem>>, %arg2: memref<24x2xf32, #tpu.memory_space<vmem>>, %arg3: memref<24x8xf32, #tpu.memory_space<vmem>>, %arg4: memref<16x32xf32, #tpu.memory_space<vmem>>, %arg5: memref<1x32xf32, #tpu.memory_space<vmem>>, %arg6: memref<32x96xf32, #tpu.memory_space<vmem>>, %arg7: memref<32x96xf32, #tpu.memory_space<vmem>>, %arg8: memref<1x96xf32, #tpu.memory_space<vmem>>, %arg9: memref<1x96xf32, #tpu.memory_space<vmem>>, %arg10: memref<64x96xf32, #tpu.memory_space<vmem>>, %arg11: memref<32x96xf32, #tpu.memory_space<vmem>>, %arg12: memref<1x96xf32, #tpu.memory_space<vmem>>, %arg13: memref<1x96xf32, #tpu.memory_space<vmem>>, %arg14: memref<64x96xf32, #tpu.memory_space<vmem>>, %arg15: memref<32x96xf32, #tpu.memory_space<vmem>>, %arg16: memref<1x96xf32, #tpu.memory_space<vmem>>, %arg17: memref<1x96xf32, #tpu.memory_space<vmem>>, %arg18: memref<64x2xf32, #tpu.memory_space<vmem>>, %arg19: memref<1x2xf32, #tpu.memory_space<vmem>>, %arg20: memref<32x8xf32, #tpu.memory_space<vmem>>, %arg21: memref<32x8xf32, #tpu.memory_space<vmem>>, %arg22: memref<64x6xf32, #tpu.memory_space<vmem>>, %arg23: memref<1x6xf32, #tpu.memory_space<vmem>>, %arg24: memref<8x6xf32, #tpu.memory_space<vmem>>, %arg25: memref<8x32xf32, #tpu.memory_space<vmem>>) attributes {dimension_semantics = [], scalar_prefetch = 0 : i64, scratch_operands = 0 : i64, tpu.core_type = #tpu.core_type<tc>} {
    %c0 = arith.constant 0 : index
    %c0_0 = arith.constant 0 : index
    %0 = vector.load %arg0[%c0, %c0_0] : memref<8x16xf32, #tpu.memory_space<vmem>>, vector<8x16xf32>
    %c0_1 = arith.constant 0 : index
    %c0_2 = arith.constant 0 : index
    %1 = vector.load %arg4[%c0_1, %c0_2] : memref<16x32xf32, #tpu.memory_space<vmem>>, vector<16x32xf32>
    %2 = arith.truncf %0 : vector<8x16xf32> to vector<8x16xbf16>
    %3 = arith.truncf %1 : vector<16x32xf32> to vector<16x32xbf16>
    %cst = arith.constant dense<0.000000e+00> : vector<8x32xf32>
    %4 = tpu.matmul %2, %3, %cst {dimension_numbers = #tpu.dot_dimension_numbers<[1], [0], [0], [1], [0, 0, 1, 1], [], []>} : vector<8x16xbf16>, vector<16x32xbf16>, vector<8x32xf32> -> vector<8x32xf32>
    %c0_3 = arith.constant 0 : index
    %c0_4 = arith.constant 0 : index
    %5 = vector.load %arg5[%c0_3, %c0_4] : memref<1x32xf32, #tpu.memory_space<vmem>>, vector<1x32xf32>
    %6 = vector.broadcast %5 : vector<1x32xf32> to vector<8x32xf32>
    %7 = arith.addf %4, %6 : vector<8x32xf32>
    %cst_5 = arith.constant 0.000000e+00 : f32
    %8 = vector.broadcast %cst_5 : f32 to vector<8x32xf32>
    %9 = arith.maximumf %7, %8 : vector<8x32xf32>
    %c0_6 = arith.constant 0 : index
    %c0_7 = arith.constant 0 : index
    %10 = vector.load %arg6[%c0_6, %c0_7] : memref<32x96xf32, #tpu.memory_space<vmem>>, vector<32x96xf32>
    %11 = arith.truncf %9 : vector<8x32xf32> to vector<8x32xbf16>
    %12 = arith.truncf %10 : vector<32x96xf32> to vector<32x96xbf16>
    %cst_8 = arith.constant dense<0.000000e+00> : vector<8x96xf32>
    %13 = tpu.matmul %11, %12, %cst_8 {dimension_numbers = #tpu.dot_dimension_numbers<[1], [0], [0], [1], [0, 0, 1, 1], [], []>} : vector<8x32xbf16>, vector<32x96xbf16>, vector<8x96xf32> -> vector<8x96xf32>
    %c0_9 = arith.constant 0 : index
    %c0_10 = arith.constant 0 : index
    %14 = vector.load %arg8[%c0_9, %c0_10] : memref<1x96xf32, #tpu.memory_space<vmem>>, vector<1x96xf32>
    %15 = vector.broadcast %14 : vector<1x96xf32> to vector<8x96xf32>
    %16 = arith.addf %13, %15 : vector<8x96xf32>
    %c0_11 = arith.constant 0 : index
    %c0_12 = arith.constant 0 : index
    %17 = vector.load %arg1[%c0_11, %c0_12] : memref<8x32xf32, #tpu.memory_space<vmem>>, vector<8x32xf32>
    %c0_13 = arith.constant 0 : index
    %c0_14 = arith.constant 0 : index
    %18 = vector.load %arg7[%c0_13, %c0_14] : memref<32x96xf32, #tpu.memory_space<vmem>>, vector<32x96xf32>
    %c0_15 = arith.constant 0 : index
    %c0_16 = arith.constant 0 : index
    %19 = vector.load %arg9[%c0_15, %c0_16] : memref<1x96xf32, #tpu.memory_space<vmem>>, vector<1x96xf32>
    %20 = arith.truncf %17 : vector<8x32xf32> to vector<8x32xbf16>
    %21 = arith.truncf %18 : vector<32x96xf32> to vector<32x96xbf16>
    %cst_17 = arith.constant dense<0.000000e+00> : vector<8x96xf32>
    %22 = tpu.matmul %20, %21, %cst_17 {dimension_numbers = #tpu.dot_dimension_numbers<[1], [0], [0], [1], [0, 0, 1, 1], [], []>} : vector<8x32xbf16>, vector<32x96xbf16>, vector<8x96xf32> -> vector<8x96xf32>
    %23 = vector.broadcast %19 : vector<1x96xf32> to vector<8x96xf32>
    %24 = arith.addf %22, %23 : vector<8x96xf32>
    %25 = vector.extract_strided_slice %16 {offsets = [0, 0], sizes = [8, 32], strides = [1, 1]} : vector<8x96xf32> to vector<8x32xf32>
    %26 = vector.extract_strided_slice %24 {offsets = [0, 0], sizes = [8, 32], strides = [1, 1]} : vector<8x96xf32> to vector<8x32xf32>
    %27 = arith.addf %25, %26 : vector<8x32xf32>
    %28 = arith.negf %27 : vector<8x32xf32>
    %29 = math.exp %28 : vector<8x32xf32>
    %cst_18 = arith.constant 1.000000e+00 : f32
    %30 = vector.broadcast %cst_18 : f32 to vector<8x32xf32>
    %31 = arith.addf %30, %29 : vector<8x32xf32>
    %32 = arith.divf %30, %31 : vector<8x32xf32>
    %33 = vector.extract_strided_slice %16 {offsets = [0, 32], sizes = [8, 32], strides = [1, 1]} : vector<8x96xf32> to vector<8x32xf32>
    %34 = vector.extract_strided_slice %24 {offsets = [0, 32], sizes = [8, 32], strides = [1, 1]} : vector<8x96xf32> to vector<8x32xf32>
    %35 = arith.addf %33, %34 : vector<8x32xf32>
    %36 = arith.negf %35 : vector<8x32xf32>
    %37 = math.exp %36 : vector<8x32xf32>
    %cst_19 = arith.constant 1.000000e+00 : f32
    %38 = vector.broadcast %cst_19 : f32 to vector<8x32xf32>
    %39 = arith.addf %38, %37 : vector<8x32xf32>
    %40 = arith.divf %38, %39 : vector<8x32xf32>
    %41 = vector.extract_strided_slice %16 {offsets = [0, 64], sizes = [8, 32], strides = [1, 1]} : vector<8x96xf32> to vector<8x32xf32>
    %42 = vector.extract_strided_slice %24 {offsets = [0, 64], sizes = [8, 32], strides = [1, 1]} : vector<8x96xf32> to vector<8x32xf32>
    %43 = arith.mulf %32, %42 : vector<8x32xf32>
    %44 = arith.addf %41, %43 : vector<8x32xf32>
    %45 = math.tanh %44 : vector<8x32xf32>
    %cst_20 = arith.constant 1.000000e+00 : f32
    %46 = vector.broadcast %cst_20 : f32 to vector<8x32xf32>
    %47 = arith.subf %46, %40 : vector<8x32xf32>
    %48 = arith.mulf %47, %45 : vector<8x32xf32>
    %49 = arith.mulf %40, %17 : vector<8x32xf32>
    %50 = arith.addf %48, %49 : vector<8x32xf32>
    %c0_21 = arith.constant 0 : index
    %c0_22 = arith.constant 0 : index
    %51 = vector.load %arg25[%c0_21, %c0_22] : memref<8x32xf32, #tpu.memory_space<vmem>>, vector<8x32xf32>
    tpu.vector_store %arg25[%c0_21, %c0_22], %50 {strides = array<i32>} : memref<8x32xf32, #tpu.memory_space<vmem>>, vector<8x32xf32>,
    %52 = tpu.concatenate %50, %50, %50 in 0 : vector<8x32xf32>, vector<8x32xf32>, vector<8x32xf32> -> vector<24x32xf32>
    %c0_23 = arith.constant 0 : index
    %c0_24 = arith.constant 0 : index
    %53 = vector.load %arg3[%c0_23, %c0_24] : memref<24x8xf32, #tpu.memory_space<vmem>>, vector<24x8xf32>
    %54 = arith.truncf %53 : vector<24x8xf32> to vector<24x8xbf16>
    %55 = arith.truncf %50 : vector<8x32xf32> to vector<8x32xbf16>
    %cst_25 = arith.constant dense<0.000000e+00> : vector<24x32xf32>
    %56 = tpu.matmul %54, %55, %cst_25 {dimension_numbers = #tpu.dot_dimension_numbers<[1], [0], [0], [1], [0, 0, 1, 1], [], []>} : vector<24x8xbf16>, vector<8x32xbf16>, vector<24x32xf32> -> vector<24x32xf32>
    %57 = tpu.concatenate %52, %56 in 1 : vector<24x32xf32>, vector<24x32xf32> -> vector<24x64xf32>
    %c0_26 = arith.constant 0 : index
    %c0_27 = arith.constant 0 : index
    %58 = vector.load %arg10[%c0_26, %c0_27] : memref<64x96xf32, #tpu.memory_space<vmem>>, vector<64x96xf32>
    %59 = arith.truncf %57 : vector<24x64xf32> to vector<24x64xbf16>
    %60 = arith.truncf %58 : vector<64x96xf32> to vector<64x96xbf16>
    %cst_28 = arith.constant dense<0.000000e+00> : vector<24x96xf32>
    %61 = tpu.matmul %59, %60, %cst_28 {dimension_numbers = #tpu.dot_dimension_numbers<[1], [0], [0], [1], [0, 0, 1, 1], [], []>} : vector<24x64xbf16>, vector<64x96xbf16>, vector<24x96xf32> -> vector<24x96xf32>
    %c0_29 = arith.constant 0 : index
    %c0_30 = arith.constant 0 : index
    %62 = vector.load %arg12[%c0_29, %c0_30] : memref<1x96xf32, #tpu.memory_space<vmem>>, vector<1x96xf32>
    %63 = vector.broadcast %62 : vector<1x96xf32> to vector<24x96xf32>
    %64 = arith.addf %61, %63 : vector<24x96xf32>
    %c0_31 = arith.constant 0 : index
    %c0_32 = arith.constant 0 : index
    %65 = vector.load %arg14[%c0_31, %c0_32] : memref<64x96xf32, #tpu.memory_space<vmem>>, vector<64x96xf32>
    %66 = arith.truncf %57 : vector<24x64xf32> to vector<24x64xbf16>
    %67 = arith.truncf %65 : vector<64x96xf32> to vector<64x96xbf16>
    %cst_33 = arith.constant dense<0.000000e+00> : vector<24x96xf32>
    %68 = tpu.matmul %66, %67, %cst_33 {dimension_numbers = #tpu.dot_dimension_numbers<[1], [0], [0], [1], [0, 0, 1, 1], [], []>} : vector<24x64xbf16>, vector<64x96xbf16>, vector<24x96xf32> -> vector<24x96xf32>
    %c0_34 = arith.constant 0 : index
    %c0_35 = arith.constant 0 : index
    %69 = vector.load %arg16[%c0_34, %c0_35] : memref<1x96xf32, #tpu.memory_space<vmem>>, vector<1x96xf32>
    %70 = vector.broadcast %69 : vector<1x96xf32> to vector<24x96xf32>
    %71 = arith.addf %68, %70 : vector<24x96xf32>
    %c0_36 = arith.constant 0 : index
    %c0_37 = arith.constant 0 : index
    %72 = vector.load %arg11[%c0_36, %c0_37] : memref<32x96xf32, #tpu.memory_space<vmem>>, vector<32x96xf32>
    %73 = arith.truncf %72 : vector<32x96xf32> to vector<32x96xbf16>
    %c0_38 = arith.constant 0 : index
    %c0_39 = arith.constant 0 : index
    %74 = vector.load %arg15[%c0_38, %c0_39] : memref<32x96xf32, #tpu.memory_space<vmem>>, vector<32x96xf32>
    %75 = arith.truncf %74 : vector<32x96xf32> to vector<32x96xbf16>
    %c0_40 = arith.constant 0 : index
    %c0_41 = arith.constant 0 : index
    %76 = vector.load %arg13[%c0_40, %c0_41] : memref<1x96xf32, #tpu.memory_space<vmem>>, vector<1x96xf32>
    %77 = vector.shape_cast %76 : vector<1x96xf32> to vector<1x96xf32>
    %78 = vector.broadcast %77 : vector<1x96xf32> to vector<8x96xf32>
    %c0_42 = arith.constant 0 : index
    %c0_43 = arith.constant 0 : index
    %79 = vector.load %arg17[%c0_42, %c0_43] : memref<1x96xf32, #tpu.memory_space<vmem>>, vector<1x96xf32>
    %80 = vector.shape_cast %79 : vector<1x96xf32> to vector<1x96xf32>
    %81 = vector.broadcast %80 : vector<1x96xf32> to vector<8x96xf32>
    %cst_44 = arith.constant 0.000000e+00 : f32
    %82 = vector.broadcast %cst_44 : f32 to vector<8x32xf32>
    %83 = vector.extract_strided_slice %64 {offsets = [0, 0], sizes = [8, 96], strides = [1, 1]} : vector<24x96xf32> to vector<8x96xf32>
    %84 = arith.truncf %82 : vector<8x32xf32> to vector<8x32xbf16>
    %cst_45 = arith.constant dense<0.000000e+00> : vector<8x96xf32>
    %85 = tpu.matmul %84, %73, %cst_45 {dimension_numbers = #tpu.dot_dimension_numbers<[1], [0], [0], [1], [0, 0, 1, 1], [], []>} : vector<8x32xbf16>, vector<32x96xbf16>, vector<8x96xf32> -> vector<8x96xf32>
    %86 = arith.addf %85, %78 : vector<8x96xf32>
    %87 = vector.extract_strided_slice %83 {offsets = [0, 0], sizes = [8, 32], strides = [1, 1]} : vector<8x96xf32> to vector<8x32xf32>
    %88 = vector.extract_strided_slice %86 {offsets = [0, 0], sizes = [8, 32], strides = [1, 1]} : vector<8x96xf32> to vector<8x32xf32>
    %89 = arith.addf %87, %88 : vector<8x32xf32>
    %90 = arith.negf %89 : vector<8x32xf32>
    %91 = math.exp %90 : vector<8x32xf32>
    %cst_46 = arith.constant 1.000000e+00 : f32
    %92 = vector.broadcast %cst_46 : f32 to vector<8x32xf32>
    %93 = arith.addf %92, %91 : vector<8x32xf32>
    %94 = arith.divf %92, %93 : vector<8x32xf32>
    %95 = vector.extract_strided_slice %83 {offsets = [0, 32], sizes = [8, 32], strides = [1, 1]} : vector<8x96xf32> to vector<8x32xf32>
    %96 = vector.extract_strided_slice %86 {offsets = [0, 32], sizes = [8, 32], strides = [1, 1]} : vector<8x96xf32> to vector<8x32xf32>
    %97 = arith.addf %95, %96 : vector<8x32xf32>
    %98 = arith.negf %97 : vector<8x32xf32>
    %99 = math.exp %98 : vector<8x32xf32>
    %cst_47 = arith.constant 1.000000e+00 : f32
    %100 = vector.broadcast %cst_47 : f32 to vector<8x32xf32>
    %101 = arith.addf %100, %99 : vector<8x32xf32>
    %102 = arith.divf %100, %101 : vector<8x32xf32>
    %103 = vector.extract_strided_slice %83 {offsets = [0, 64], sizes = [8, 32], strides = [1, 1]} : vector<8x96xf32> to vector<8x32xf32>
    %104 = vector.extract_strided_slice %86 {offsets = [0, 64], sizes = [8, 32], strides = [1, 1]} : vector<8x96xf32> to vector<8x32xf32>
    %105 = arith.mulf %94, %104 : vector<8x32xf32>
    %106 = arith.addf %103, %105 : vector<8x32xf32>
    %107 = math.tanh %106 : vector<8x32xf32>
    %cst_48 = arith.constant 1.000000e+00 : f32
    %108 = vector.broadcast %cst_48 : f32 to vector<8x32xf32>
    %109 = arith.subf %108, %102 : vector<8x32xf32>
    %110 = arith.mulf %109, %107 : vector<8x32xf32>
    %111 = arith.mulf %102, %82 : vector<8x32xf32>
    %112 = arith.addf %110, %111 : vector<8x32xf32>
    %113 = vector.extract_strided_slice %64 {offsets = [8, 0], sizes = [8, 96], strides = [1, 1]} : vector<24x96xf32> to vector<8x96xf32>
    %114 = arith.truncf %112 : vector<8x32xf32> to vector<8x32xbf16>
    %cst_49 = arith.constant dense<0.000000e+00> : vector<8x96xf32>
    %115 = tpu.matmul %114, %73, %cst_49 {dimension_numbers = #tpu.dot_dimension_numbers<[1], [0], [0], [1], [0, 0, 1, 1], [], []>} : vector<8x32xbf16>, vector<32x96xbf16>, vector<8x96xf32> -> vector<8x96xf32>
    %116 = arith.addf %115, %78 : vector<8x96xf32>
    %117 = vector.extract_strided_slice %113 {offsets = [0, 0], sizes = [8, 32], strides = [1, 1]} : vector<8x96xf32> to vector<8x32xf32>
    %118 = vector.extract_strided_slice %116 {offsets = [0, 0], sizes = [8, 32], strides = [1, 1]} : vector<8x96xf32> to vector<8x32xf32>
    %119 = arith.addf %117, %118 : vector<8x32xf32>
    %120 = arith.negf %119 : vector<8x32xf32>
    %121 = math.exp %120 : vector<8x32xf32>
    %cst_50 = arith.constant 1.000000e+00 : f32
    %122 = vector.broadcast %cst_50 : f32 to vector<8x32xf32>
    %123 = arith.addf %122, %121 : vector<8x32xf32>
    %124 = arith.divf %122, %123 : vector<8x32xf32>
    %125 = vector.extract_strided_slice %113 {offsets = [0, 32], sizes = [8, 32], strides = [1, 1]} : vector<8x96xf32> to vector<8x32xf32>
    %126 = vector.extract_strided_slice %116 {offsets = [0, 32], sizes = [8, 32], strides = [1, 1]} : vector<8x96xf32> to vector<8x32xf32>
    %127 = arith.addf %125, %126 : vector<8x32xf32>
    %128 = arith.negf %127 : vector<8x32xf32>
    %129 = math.exp %128 : vector<8x32xf32>
    %cst_51 = arith.constant 1.000000e+00 : f32
    %130 = vector.broadcast %cst_51 : f32 to vector<8x32xf32>
    %131 = arith.addf %130, %129 : vector<8x32xf32>
    %132 = arith.divf %130, %131 : vector<8x32xf32>
    %133 = vector.extract_strided_slice %113 {offsets = [0, 64], sizes = [8, 32], strides = [1, 1]} : vector<8x96xf32> to vector<8x32xf32>
    %134 = vector.extract_strided_slice %116 {offsets = [0, 64], sizes = [8, 32], strides = [1, 1]} : vector<8x96xf32> to vector<8x32xf32>
    %135 = arith.mulf %124, %134 : vector<8x32xf32>
    %136 = arith.addf %133, %135 : vector<8x32xf32>
    %137 = math.tanh %136 : vector<8x32xf32>
    %cst_52 = arith.constant 1.000000e+00 : f32
    %138 = vector.broadcast %cst_52 : f32 to vector<8x32xf32>
    %139 = arith.subf %138, %132 : vector<8x32xf32>
    %140 = arith.mulf %139, %137 : vector<8x32xf32>
    %141 = arith.mulf %132, %112 : vector<8x32xf32>
    %142 = arith.addf %140, %141 : vector<8x32xf32>
    %143 = vector.extract_strided_slice %64 {offsets = [16, 0], sizes = [8, 96], strides = [1, 1]} : vector<24x96xf32> to vector<8x96xf32>
    %144 = arith.truncf %142 : vector<8x32xf32> to vector<8x32xbf16>
    %cst_53 = arith.constant dense<0.000000e+00> : vector<8x96xf32>
    %145 = tpu.matmul %144, %73, %cst_53 {dimension_numbers = #tpu.dot_dimension_numbers<[1], [0], [0], [1], [0, 0, 1, 1], [], []>} : vector<8x32xbf16>, vector<32x96xbf16>, vector<8x96xf32> -> vector<8x96xf32>
    %146 = arith.addf %145, %78 : vector<8x96xf32>
    %147 = vector.extract_strided_slice %143 {offsets = [0, 0], sizes = [8, 32], strides = [1, 1]} : vector<8x96xf32> to vector<8x32xf32>
    %148 = vector.extract_strided_slice %146 {offsets = [0, 0], sizes = [8, 32], strides = [1, 1]} : vector<8x96xf32> to vector<8x32xf32>
    %149 = arith.addf %147, %148 : vector<8x32xf32>
    %150 = arith.negf %149 : vector<8x32xf32>
    %151 = math.exp %150 : vector<8x32xf32>
    %cst_54 = arith.constant 1.000000e+00 : f32
    %152 = vector.broadcast %cst_54 : f32 to vector<8x32xf32>
    %153 = arith.addf %152, %151 : vector<8x32xf32>
    %154 = arith.divf %152, %153 : vector<8x32xf32>
    %155 = vector.extract_strided_slice %143 {offsets = [0, 32], sizes = [8, 32], strides = [1, 1]} : vector<8x96xf32> to vector<8x32xf32>
    %156 = vector.extract_strided_slice %146 {offsets = [0, 32], sizes = [8, 32], strides = [1, 1]} : vector<8x96xf32> to vector<8x32xf32>
    %157 = arith.addf %155, %156 : vector<8x32xf32>
    %158 = arith.negf %157 : vector<8x32xf32>
    %159 = math.exp %158 : vector<8x32xf32>
    %cst_55 = arith.constant 1.000000e+00 : f32
    %160 = vector.broadcast %cst_55 : f32 to vector<8x32xf32>
    %161 = arith.addf %160, %159 : vector<8x32xf32>
    %162 = arith.divf %160, %161 : vector<8x32xf32>
    %163 = vector.extract_strided_slice %143 {offsets = [0, 64], sizes = [8, 32], strides = [1, 1]} : vector<8x96xf32> to vector<8x32xf32>
    %164 = vector.extract_strided_slice %146 {offsets = [0, 64], sizes = [8, 32], strides = [1, 1]} : vector<8x96xf32> to vector<8x32xf32>
    %165 = arith.mulf %154, %164 : vector<8x32xf32>
    %166 = arith.addf %163, %165 : vector<8x32xf32>
    %167 = math.tanh %166 : vector<8x32xf32>
    %cst_56 = arith.constant 1.000000e+00 : f32
    %168 = vector.broadcast %cst_56 : f32 to vector<8x32xf32>
    %169 = arith.subf %168, %162 : vector<8x32xf32>
    %170 = arith.mulf %169, %167 : vector<8x32xf32>
    %171 = arith.mulf %162, %142 : vector<8x32xf32>
    %172 = arith.addf %170, %171 : vector<8x32xf32>
    %cst_57 = arith.constant 0.000000e+00 : f32
    %173 = vector.broadcast %cst_57 : f32 to vector<8x32xf32>
    %174 = vector.extract_strided_slice %71 {offsets = [16, 0], sizes = [8, 96], strides = [1, 1]} : vector<24x96xf32> to vector<8x96xf32>
    %175 = arith.truncf %173 : vector<8x32xf32> to vector<8x32xbf16>
    %cst_58 = arith.constant dense<0.000000e+00> : vector<8x96xf32>
    %176 = tpu.matmul %175, %75, %cst_58 {dimension_numbers = #tpu.dot_dimension_numbers<[1], [0], [0], [1], [0, 0, 1, 1], [], []>} : vector<8x32xbf16>, vector<32x96xbf16>, vector<8x96xf32> -> vector<8x96xf32>
    %177 = arith.addf %176, %81 : vector<8x96xf32>
    %178 = vector.extract_strided_slice %174 {offsets = [0, 0], sizes = [8, 32], strides = [1, 1]} : vector<8x96xf32> to vector<8x32xf32>
    %179 = vector.extract_strided_slice %177 {offsets = [0, 0], sizes = [8, 32], strides = [1, 1]} : vector<8x96xf32> to vector<8x32xf32>
    %180 = arith.addf %178, %179 : vector<8x32xf32>
    %181 = arith.negf %180 : vector<8x32xf32>
    %182 = math.exp %181 : vector<8x32xf32>
    %cst_59 = arith.constant 1.000000e+00 : f32
    %183 = vector.broadcast %cst_59 : f32 to vector<8x32xf32>
    %184 = arith.addf %183, %182 : vector<8x32xf32>
    %185 = arith.divf %183, %184 : vector<8x32xf32>
    %186 = vector.extract_strided_slice %174 {offsets = [0, 32], sizes = [8, 32], strides = [1, 1]} : vector<8x96xf32> to vector<8x32xf32>
    %187 = vector.extract_strided_slice %177 {offsets = [0, 32], sizes = [8, 32], strides = [1, 1]} : vector<8x96xf32> to vector<8x32xf32>
    %188 = arith.addf %186, %187 : vector<8x32xf32>
    %189 = arith.negf %188 : vector<8x32xf32>
    %190 = math.exp %189 : vector<8x32xf32>
    %cst_60 = arith.constant 1.000000e+00 : f32
    %191 = vector.broadcast %cst_60 : f32 to vector<8x32xf32>
    %192 = arith.addf %191, %190 : vector<8x32xf32>
    %193 = arith.divf %191, %192 : vector<8x32xf32>
    %194 = vector.extract_strided_slice %174 {offsets = [0, 64], sizes = [8, 32], strides = [1, 1]} : vector<8x96xf32> to vector<8x32xf32>
    %195 = vector.extract_strided_slice %177 {offsets = [0, 64], sizes = [8, 32], strides = [1, 1]} : vector<8x96xf32> to vector<8x32xf32>
    %196 = arith.mulf %185, %195 : vector<8x32xf32>
    %197 = arith.addf %194, %196 : vector<8x32xf32>
    %198 = math.tanh %197 : vector<8x32xf32>
    %cst_61 = arith.constant 1.000000e+00 : f32
    %199 = vector.broadcast %cst_61 : f32 to vector<8x32xf32>
    %200 = arith.subf %199, %193 : vector<8x32xf32>
    %201 = arith.mulf %200, %198 : vector<8x32xf32>
    %202 = arith.mulf %193, %173 : vector<8x32xf32>
    %203 = arith.addf %201, %202 : vector<8x32xf32>
    %204 = vector.extract_strided_slice %71 {offsets = [8, 0], sizes = [8, 96], strides = [1, 1]} : vector<24x96xf32> to vector<8x96xf32>
    %205 = arith.truncf %203 : vector<8x32xf32> to vector<8x32xbf16>
    %cst_62 = arith.constant dense<0.000000e+00> : vector<8x96xf32>
    %206 = tpu.matmul %205, %75, %cst_62 {dimension_numbers = #tpu.dot_dimension_numbers<[1], [0], [0], [1], [0, 0, 1, 1], [], []>} : vector<8x32xbf16>, vector<32x96xbf16>, vector<8x96xf32> -> vector<8x96xf32>
    %207 = arith.addf %206, %81 : vector<8x96xf32>
    %208 = vector.extract_strided_slice %204 {offsets = [0, 0], sizes = [8, 32], strides = [1, 1]} : vector<8x96xf32> to vector<8x32xf32>
    %209 = vector.extract_strided_slice %207 {offsets = [0, 0], sizes = [8, 32], strides = [1, 1]} : vector<8x96xf32> to vector<8x32xf32>
    %210 = arith.addf %208, %209 : vector<8x32xf32>
    %211 = arith.negf %210 : vector<8x32xf32>
    %212 = math.exp %211 : vector<8x32xf32>
    %cst_63 = arith.constant 1.000000e+00 : f32
    %213 = vector.broadcast %cst_63 : f32 to vector<8x32xf32>
    %214 = arith.addf %213, %212 : vector<8x32xf32>
    %215 = arith.divf %213, %214 : vector<8x32xf32>
    %216 = vector.extract_strided_slice %204 {offsets = [0, 32], sizes = [8, 32], strides = [1, 1]} : vector<8x96xf32> to vector<8x32xf32>
    %217 = vector.extract_strided_slice %207 {offsets = [0, 32], sizes = [8, 32], strides = [1, 1]} : vector<8x96xf32> to vector<8x32xf32>
    %218 = arith.addf %216, %217 : vector<8x32xf32>
    %219 = arith.negf %218 : vector<8x32xf32>
    %220 = math.exp %219 : vector<8x32xf32>
    %cst_64 = arith.constant 1.000000e+00 : f32
    %221 = vector.broadcast %cst_64 : f32 to vector<8x32xf32>
    %222 = arith.addf %221, %220 : vector<8x32xf32>
    %223 = arith.divf %221, %222 : vector<8x32xf32>
    %224 = vector.extract_strided_slice %204 {offsets = [0, 64], sizes = [8, 32], strides = [1, 1]} : vector<8x96xf32> to vector<8x32xf32>
    %225 = vector.extract_strided_slice %207 {offsets = [0, 64], sizes = [8, 32], strides = [1, 1]} : vector<8x96xf32> to vector<8x32xf32>
    %226 = arith.mulf %215, %225 : vector<8x32xf32>
    %227 = arith.addf %224, %226 : vector<8x32xf32>
    %228 = math.tanh %227 : vector<8x32xf32>
    %cst_65 = arith.constant 1.000000e+00 : f32
    %229 = vector.broadcast %cst_65 : f32 to vector<8x32xf32>
    %230 = arith.subf %229, %223 : vector<8x32xf32>
    %231 = arith.mulf %230, %228 : vector<8x32xf32>
    %232 = arith.mulf %223, %203 : vector<8x32xf32>
    %233 = arith.addf %231, %232 : vector<8x32xf32>
    %234 = vector.extract_strided_slice %71 {offsets = [0, 0], sizes = [8, 96], strides = [1, 1]} : vector<24x96xf32> to vector<8x96xf32>
    %235 = arith.truncf %233 : vector<8x32xf32> to vector<8x32xbf16>
    %cst_66 = arith.constant dense<0.000000e+00> : vector<8x96xf32>
    %236 = tpu.matmul %235, %75, %cst_66 {dimension_numbers = #tpu.dot_dimension_numbers<[1], [0], [0], [1], [0, 0, 1, 1], [], []>} : vector<8x32xbf16>, vector<32x96xbf16>, vector<8x96xf32> -> vector<8x96xf32>
    %237 = arith.addf %236, %81 : vector<8x96xf32>
    %238 = vector.extract_strided_slice %234 {offsets = [0, 0], sizes = [8, 32], strides = [1, 1]} : vector<8x96xf32> to vector<8x32xf32>
    %239 = vector.extract_strided_slice %237 {offsets = [0, 0], sizes = [8, 32], strides = [1, 1]} : vector<8x96xf32> to vector<8x32xf32>
    %240 = arith.addf %238, %239 : vector<8x32xf32>
    %241 = arith.negf %240 : vector<8x32xf32>
    %242 = math.exp %241 : vector<8x32xf32>
    %cst_67 = arith.constant 1.000000e+00 : f32
    %243 = vector.broadcast %cst_67 : f32 to vector<8x32xf32>
    %244 = arith.addf %243, %242 : vector<8x32xf32>
    %245 = arith.divf %243, %244 : vector<8x32xf32>
    %246 = vector.extract_strided_slice %234 {offsets = [0, 32], sizes = [8, 32], strides = [1, 1]} : vector<8x96xf32> to vector<8x32xf32>
    %247 = vector.extract_strided_slice %237 {offsets = [0, 32], sizes = [8, 32], strides = [1, 1]} : vector<8x96xf32> to vector<8x32xf32>
    %248 = arith.addf %246, %247 : vector<8x32xf32>
    %249 = arith.negf %248 : vector<8x32xf32>
    %250 = math.exp %249 : vector<8x32xf32>
    %cst_68 = arith.constant 1.000000e+00 : f32
    %251 = vector.broadcast %cst_68 : f32 to vector<8x32xf32>
    %252 = arith.addf %251, %250 : vector<8x32xf32>
    %253 = arith.divf %251, %252 : vector<8x32xf32>
    %254 = vector.extract_strided_slice %234 {offsets = [0, 64], sizes = [8, 32], strides = [1, 1]} : vector<8x96xf32> to vector<8x32xf32>
    %255 = vector.extract_strided_slice %237 {offsets = [0, 64], sizes = [8, 32], strides = [1, 1]} : vector<8x96xf32> to vector<8x32xf32>
    %256 = arith.mulf %245, %255 : vector<8x32xf32>
    %257 = arith.addf %254, %256 : vector<8x32xf32>
    %258 = math.tanh %257 : vector<8x32xf32>
    %cst_69 = arith.constant 1.000000e+00 : f32
    %259 = vector.broadcast %cst_69 : f32 to vector<8x32xf32>
    %260 = arith.subf %259, %253 : vector<8x32xf32>
    %261 = arith.mulf %260, %258 : vector<8x32xf32>
    %262 = arith.mulf %253, %233 : vector<8x32xf32>
    %263 = arith.addf %261, %262 : vector<8x32xf32>
    %264 = tpu.concatenate %112, %263 in 1 : vector<8x32xf32>, vector<8x32xf32> -> vector<8x64xf32>
    %265 = tpu.concatenate %142, %233 in 1 : vector<8x32xf32>, vector<8x32xf32> -> vector<8x64xf32>
    %266 = tpu.concatenate %172, %203 in 1 : vector<8x32xf32>, vector<8x32xf32> -> vector<8x64xf32>
    %267 = tpu.concatenate %264, %265, %266 in 0 : vector<8x64xf32>, vector<8x64xf32>, vector<8x64xf32> -> vector<24x64xf32>
    %c0_70 = arith.constant 0 : index
    %c0_71 = arith.constant 0 : index
    %268 = vector.load %arg18[%c0_70, %c0_71] : memref<64x2xf32, #tpu.memory_space<vmem>>, vector<64x2xf32>
    %269 = arith.truncf %267 : vector<24x64xf32> to vector<24x64xbf16>
    %270 = arith.truncf %268 : vector<64x2xf32> to vector<64x2xbf16>
    %cst_72 = arith.constant dense<0.000000e+00> : vector<24x2xf32>
    %271 = tpu.matmul %269, %270, %cst_72 {dimension_numbers = #tpu.dot_dimension_numbers<[1], [0], [0], [1], [0, 0, 1, 1], [], []>} : vector<24x64xbf16>, vector<64x2xbf16>, vector<24x2xf32> -> vector<24x2xf32>
    %c0_73 = arith.constant 0 : index
    %c0_74 = arith.constant 0 : index
    %272 = vector.load %arg19[%c0_73, %c0_74] : memref<1x2xf32, #tpu.memory_space<vmem>>, vector<1x2xf32>
    %273 = vector.broadcast %272 : vector<1x2xf32> to vector<24x2xf32>
    %274 = arith.addf %271, %273 : vector<24x2xf32>
    %c0_75 = arith.constant 0 : index
    %c0_76 = arith.constant 0 : index
    %275 = vector.load %arg2[%c0_75, %c0_76] : memref<24x2xf32, #tpu.memory_space<vmem>>, vector<24x2xf32>
    %276 = arith.addf %274, %275 : vector<24x2xf32>
    %cst_77 = arith.constant 1.000000e+00 : f32
    %277 = vector.broadcast %cst_77 : f32 to vector<24x2xf32>
    %278 = arith.mulf %276, %277 : vector<24x2xf32>
    %cst_78 = arith.constant dense<0xFF800000> : vector<24xf32>
    %279 = vector.multi_reduction <maximumf>, %278, %cst_78 [1] : vector<24x2xf32> to vector<24xf32>
    %280 = vector.shape_cast %279 : vector<24xf32> to vector<24x1xf32>
    %281 = vector.broadcast %280 : vector<24x1xf32> to vector<24x2xf32>
    %282 = arith.subf %278, %281 : vector<24x2xf32>
    %283 = math.exp %282 : vector<24x2xf32>
    %cst_79 = arith.constant dense<0.000000e+00> : vector<24xf32>
    %284 = vector.multi_reduction <add>, %283, %cst_79 [1] : vector<24x2xf32> to vector<24xf32>
    %285 = vector.shape_cast %284 : vector<24xf32> to vector<24x1xf32>
    %286 = vector.broadcast %285 : vector<24x1xf32> to vector<24x2xf32>
    %287 = arith.divf %283, %286 : vector<24x2xf32>
    %288 = vector.extract_strided_slice %287 {offsets = [0, 1], sizes = [24, 1], strides = [1, 1]} : vector<24x2xf32> to vector<24x1xf32>
    %289 = vector.extract_strided_slice %288 {offsets = [0, 0], sizes = [8, 1], strides = [1, 1]} : vector<24x1xf32> to vector<8x1xf32>
    %290 = vector.extract_strided_slice %288 {offsets = [8, 0], sizes = [8, 1], strides = [1, 1]} : vector<24x1xf32> to vector<8x1xf32>
    %291 = vector.extract_strided_slice %288 {offsets = [16, 0], sizes = [8, 1], strides = [1, 1]} : vector<24x1xf32> to vector<8x1xf32>
    %c0_80 = arith.constant 0 : index
    %c0_81 = arith.constant 0 : index
    %292 = vector.load %arg20[%c0_80, %c0_81] : memref<32x8xf32, #tpu.memory_space<vmem>>, vector<32x8xf32>
    %293 = arith.truncf %50 : vector<8x32xf32> to vector<8x32xbf16>
    %294 = arith.truncf %292 : vector<32x8xf32> to vector<32x8xbf16>
    %cst_82 = arith.constant dense<0.000000e+00> : vector<8x8xf32>
    %295 = tpu.matmul %293, %294, %cst_82 {dimension_numbers = #tpu.dot_dimension_numbers<[1], [0], [0], [1], [0, 0, 1, 1], [], []>} : vector<8x32xbf16>, vector<32x8xbf16>, vector<8x8xf32> -> vector<8x8xf32>
    %c0_83 = arith.constant 0 : index
    %c0_84 = arith.constant 0 : index
    %296 = vector.load %arg21[%c0_83, %c0_84] : memref<32x8xf32, #tpu.memory_space<vmem>>, vector<32x8xf32>
    %297 = arith.truncf %50 : vector<8x32xf32> to vector<8x32xbf16>
    %298 = arith.truncf %296 : vector<32x8xf32> to vector<32x8xbf16>
    %cst_85 = arith.constant dense<0.000000e+00> : vector<8x8xf32>
    %299 = tpu.matmul %297, %298, %cst_85 {dimension_numbers = #tpu.dot_dimension_numbers<[1], [0], [0], [1], [0, 0, 1, 1], [], []>} : vector<8x32xbf16>, vector<32x8xbf16>, vector<8x8xf32> -> vector<8x8xf32>
    %300 = arith.mulf %295, %299 : vector<8x8xf32>
    %cst_86 = arith.constant dense<0.000000e+00> : vector<8xf32>
    %301 = vector.multi_reduction <add>, %300, %cst_86 [1] : vector<8x8xf32> to vector<8xf32>
    %302 = vector.shape_cast %301 : vector<8xf32> to vector<8x1xf32>
    %cst_87 = arith.constant 0.353553385 : f32
    %303 = vector.broadcast %cst_87 : f32 to vector<8x1xf32>
    %304 = arith.mulf %302, %303 : vector<8x1xf32>
    %305 = arith.mulf %289, %304 : vector<8x1xf32>
    %306 = arith.mulf %290, %304 : vector<8x1xf32>
    %307 = arith.mulf %291, %304 : vector<8x1xf32>
    %308 = arith.maximumf %305, %306 : vector<8x1xf32>
    %309 = arith.maximumf %308, %307 : vector<8x1xf32>
    %310 = arith.subf %305, %309 : vector<8x1xf32>
    %311 = math.exp %310 : vector<8x1xf32>
    %312 = arith.subf %306, %309 : vector<8x1xf32>
    %313 = math.exp %312 : vector<8x1xf32>
    %314 = arith.subf %307, %309 : vector<8x1xf32>
    %315 = math.exp %314 : vector<8x1xf32>
    %316 = arith.addf %311, %313 : vector<8x1xf32>
    %317 = arith.addf %316, %315 : vector<8x1xf32>
    %318 = arith.mulf %289, %311 : vector<8x1xf32>
    %319 = arith.mulf %290, %313 : vector<8x1xf32>
    %320 = arith.addf %318, %319 : vector<8x1xf32>
    %321 = arith.mulf %291, %315 : vector<8x1xf32>
    %322 = arith.addf %320, %321 : vector<8x1xf32>
    %323 = arith.divf %322, %317 : vector<8x1xf32>
    %324 = vector.broadcast %323 : vector<8x1xf32> to vector<8x32xf32>
    %325 = arith.mulf %324, %50 : vector<8x32xf32>
    %326 = tpu.concatenate %50, %325 in 1 : vector<8x32xf32>, vector<8x32xf32> -> vector<8x64xf32>
    %c0_88 = arith.constant 0 : index
    %c0_89 = arith.constant 0 : index
    %327 = vector.load %arg22[%c0_88, %c0_89] : memref<64x6xf32, #tpu.memory_space<vmem>>, vector<64x6xf32>
    %328 = arith.truncf %326 : vector<8x64xf32> to vector<8x64xbf16>
    %329 = arith.truncf %327 : vector<64x6xf32> to vector<64x6xbf16>
    %cst_90 = arith.constant dense<0.000000e+00> : vector<8x6xf32>
    %330 = tpu.matmul %328, %329, %cst_90 {dimension_numbers = #tpu.dot_dimension_numbers<[1], [0], [0], [1], [0, 0, 1, 1], [], []>} : vector<8x64xbf16>, vector<64x6xbf16>, vector<8x6xf32> -> vector<8x6xf32>
    %c0_91 = arith.constant 0 : index
    %c0_92 = arith.constant 0 : index
    %331 = vector.load %arg23[%c0_91, %c0_92] : memref<1x6xf32, #tpu.memory_space<vmem>>, vector<1x6xf32>
    %332 = vector.broadcast %331 : vector<1x6xf32> to vector<8x6xf32>
    %333 = arith.addf %330, %332 : vector<8x6xf32>
    %c0_93 = arith.constant 0 : index
    %c0_94 = arith.constant 0 : index
    %334 = vector.load %arg24[%c0_93, %c0_94] : memref<8x6xf32, #tpu.memory_space<vmem>>, vector<8x6xf32>
    tpu.vector_store %arg24[%c0_93, %c0_94], %333 {strides = array<i32>} : memref<8x6xf32, #tpu.memory_space<vmem>>, vector<8x6xf32>,
    return
  }
}

</mosaic_0001>

<llo_original>
// kernel: tpu_custom_call.1
$region0: #{tpu_custom_call.1}
  #allocation0 [shape = 'u32[]', space=smem, size = 0x4, offset = 0x4, fixed_abs, tag = 'smem constant byte address 0x4 - core index']
  #allocation1 [shape = 'u32[144,128]{1,0:T(1,128)}', space=vmem, size = 0x12000, scoped, tag = 'internal scratch']
  %s0 = inlined_call_operand.hbm [shape: f32[8,16], index: 0, kind: input, shape index: {}]
  %s1 = inlined_call_operand.hbm [shape: f32[8,32], index: 1, kind: input, shape index: {}]
  %s2 = inlined_call_operand.vmem [shape: f32[24,2], index: 2, kind: input, shape index: {}]
  %s3 = inlined_call_operand.vmem [shape: f32[24,8], index: 3, kind: input, shape index: {}]
  %s4 = inlined_call_operand.vmem [shape: f32[16,32], index: 4, kind: input, shape index: {}]
  %s5 = inlined_call_operand.hbm [shape: f32[1,32], index: 5, kind: input, shape index: {}]
  %s6 = inlined_call_operand.vmem [shape: f32[32,96], index: 6, kind: input, shape index: {}]
  %s7 = inlined_call_operand.vmem [shape: f32[32,96], index: 7, kind: input, shape index: {}]
  %s8 = inlined_call_operand.hbm [shape: f32[1,96], index: 8, kind: input, shape index: {}]
  %s9 = inlined_call_operand.hbm [shape: f32[1,96], index: 9, kind: input, shape index: {}]
  %s10 = inlined_call_operand.vmem [shape: f32[64,96], index: 10, kind: input, shape index: {}]
  %s11 = inlined_call_operand.vmem [shape: f32[32,96], index: 11, kind: input, shape index: {}]
  %s12 = inlined_call_operand.vmem [shape: f32[1,96], index: 12, kind: input, shape index: {}]
  %s13 = inlined_call_operand.hbm [shape: f32[1,96], index: 13, kind: input, shape index: {}]
  %s14 = inlined_call_operand.vmem [shape: f32[64,96], index: 14, kind: input, shape index: {}]
  %s15 = inlined_call_operand.vmem [shape: f32[32,96], index: 15, kind: input, shape index: {}]
  %s16 = inlined_call_operand.hbm [shape: f32[1,96], index: 16, kind: input, shape index: {}]
  %s17 = inlined_call_operand.hbm [shape: f32[1,96], index: 17, kind: input, shape index: {}]
  %s18 = inlined_call_operand.vmem [shape: f32[64,2], index: 18, kind: input, shape index: {}]
  %s19 = inlined_call_operand.vmem [shape: f32[1,2], index: 19, kind: input, shape index: {}]
  %s20 = inlined_call_operand.vmem [shape: f32[32,8], index: 20, kind: input, shape index: {}]
  %s21 = inlined_call_operand.vmem [shape: f32[32,8], index: 21, kind: input, shape index: {}]
  %s22 = inlined_call_operand.vmem [shape: f32[64,6], index: 22, kind: input, shape index: {}]
  %s23 = inlined_call_operand.vmem [shape: f32[1,6], index: 23, kind: input, shape index: {}]
  %s24 = inlined_call_operand.hbm [shape: f32[8,6], index: 24, kind: output, shape index: {0}]
  %s25 = inlined_call_operand.hbm [shape: f32[8,32], index: 25, kind: output, shape index: {1}]
  %26 = xla_tuple %s24, %s25
  %s27 = sld [smem:[#allocation0]]
  $region146: #{tpu_custom_call.1} parent=0
    _
  %s29 = ssub.s32 1, %s27
  %s30 = scalar_select 0, %s29, %s27
  $region1: #{tpu_custom_call.1} parent=0
    #allocation2 [shape = 'u8[4096]{0}', space=vmem, size = 0x1000, scoped, tag = 'input window, operand 0, single buffered']
    #allocation3 [shape = 's32[1]{0}', space=sflag, size = 0x4, scoped, tag = 'scoped memory for tpu_custom_call.1']
    #allocation4 [shape = 's32[1]{0}', space=sflag, size = 0x4, scoped, tag = 'scoped memory for tpu_custom_call.1']
    #allocation5 [shape = 'u8[4096]{0}', space=vmem, size = 0x1000, scoped, tag = 'input window, operand 1, single buffered']
    #allocation6 [shape = 's32[1]{0}', space=sflag, size = 0x4, scoped, tag = 'scoped memory for tpu_custom_call.1']
    #allocation7 [shape = 'u8[512]{0}', space=vmem, size = 0x400, scoped, tag = 'input window, operand 5, single buffered']
    #allocation8 [shape = 'u8[512]{0}', space=vmem, size = 0x400, scoped, tag = 'input window, operand 8, single buffered']
    #allocation9 [shape = 's32[1]{0}', space=sflag, size = 0x4, scoped, tag = 'scoped memory for tpu_custom_call.1']
    #allocation10 [shape = 'u8[512]{0}', space=vmem, size = 0x400, scoped, tag = 'input window, operand 9, single buffered']
    #allocation11 [shape = 'u8[512]{0}', space=vmem, size = 0x400, scoped, tag = 'input window, operand 13, single buffered']
    #allocation12 [shape = 's32[1]{0}', space=sflag, size = 0x4, scoped, tag = 'scoped memory for tpu_custom_call.1']
    #allocation13 [shape = 'u8[512]{0}', space=vmem, size = 0x400, scoped, tag = 'input window, operand 16, single buffered']
    #allocation14 [shape = 'u8[512]{0}', space=vmem, size = 0x400, scoped, tag = 'input window, operand 17, single buffered']
    #allocation15 [shape = 's32[1]{0}', space=sflag, size = 0x4, scoped, tag = 'scoped memory for tpu_custom_call.1']
    #allocation16 [shape = 'u8[4096]{0}', space=vmem, size = 0x1000, scoped, tag = 'output window, operand 0, single buffered']
    #allocation17 [shape = 'u8[4096]{0}', space=vmem, size = 0x1000, scoped, tag = 'output window, operand 1, single buffered']
    #allocation18 [shape = 's32[1]{0}', space=sflag, size = 0x4, scoped, tag = 'scoped memory for tpu_custom_call.1']
    %31 = vsyncpa [#allocation3], 0
    %32 = vsyncpa [#allocation6], 0
    %33 = vsyncpa [#allocation9], 0
    %34 = vsyncpa [#allocation12], 0
    %35 = vsyncpa [#allocation15], 0
    %36 = vsyncpa [#allocation4], 0
    %37 = vsyncpa [#allocation18], 0
    // Predicated region
    $region2: #{tpu_custom_call.1} parent=1 // pred_check
      _
    $region3: #{tpu_custom_call.1} parent=1 // pred_check_branch
      %39 = sbr.rel (0) target = $region5
    $region4: #{tpu_custom_call.1} parent=1 // pred_region
      %s41 = ssub.s32 128, 128
      %42 = vsyncadd [#allocation3], %s41
      %s44 = sshll.u32 [#allocation2], 4
      %s45 = int_to_ptr.vmem [resolvable:$true] %s44
      %47 = dma.hbm_to_vmem [thread:$0]  %s0, 128, %s45, [#allocation3]
    $region5: #{tpu_custom_call.1} parent=1 // pred_fallthru
      _
    // Predicated region
    $region6: #{tpu_custom_call.1} parent=1 // pred_check
      _
    $region7: #{tpu_custom_call.1} parent=1 // pred_check_branch
      %49 = sbr.rel (0) target = $region9
    $region8: #{tpu_custom_call.1} parent=1 // pred_region
      %s51 = ssub.s32 128, 128
      %52 = vsyncadd [#allocation6], %s51
      %s54 = sshll.u32 [#allocation5], 4
      %s55 = int_to_ptr.vmem [resolvable:$true] %s54
      %57 = dma.hbm_to_vmem [thread:$0]  %s1, 128, %s55, [#allocation6]
    $region9: #{tpu_custom_call.1} parent=1 // pred_fallthru
      _
    // Predicated region
    $region10: #{tpu_custom_call.1} parent=1 // pred_check
      _
    $region11: #{tpu_custom_call.1} parent=1 // pred_check_branch
      %59 = sbr.rel (0) target = $region13
    $region12: #{tpu_custom_call.1} parent=1 // pred_region
      _
    $region13: #{tpu_custom_call.1} parent=1 // pred_fallthru
      _
    // Predicated region
    $region14: #{tpu_custom_call.1} parent=1 // pred_check
      _
    $region15: #{tpu_custom_call.1} parent=1 // pred_check_branch
      %61 = sbr.rel (0) target = $region17
    $region16: #{tpu_custom_call.1} parent=1 // pred_region
      _
    $region17: #{tpu_custom_call.1} parent=1 // pred_fallthru
      _
    // Predicated region
    $region18: #{tpu_custom_call.1} parent=1 // pred_check
      _
    $region19: #{tpu_custom_call.1} parent=1 // pred_check_branch
      %63 = sbr.rel (0) target = $region21
    $region20: #{tpu_custom_call.1} parent=1 // pred_region
      _
    $region21: #{tpu_custom_call.1} parent=1 // pred_fallthru
      _
    // Predicated region
    $region22: #{tpu_custom_call.1} parent=1 // pred_check
      _
    $region23: #{tpu_custom_call.1} parent=1 // pred_check_branch
      %65 = sbr.rel (0) target = $region25
    $region24: #{tpu_custom_call.1} parent=1 // pred_region
      %s67 = ssub.s32 16, 16
      %68 = vsyncadd [#allocation6], %s67
      %s70 = sshll.u32 [#allocation7], 4
      %s71 = int_to_ptr.vmem [resolvable:$true] %s70
      %73 = dma.hbm_to_vmem [thread:$0]  %s5, 16, %s71, [#allocation6]
    $region25: #{tpu_custom_call.1} parent=1 // pred_fallthru
      _
    // Predicated region
    $region26: #{tpu_custom_call.1} parent=1 // pred_check
      _
    $region27: #{tpu_custom_call.1} parent=1 // pred_check_branch
      %75 = sbr.rel (0) target = $region29
    $region28: #{tpu_custom_call.1} parent=1 // pred_region
      _
    $region29: #{tpu_custom_call.1} parent=1 // pred_fallthru
      _
    // Predicated region
    $region30: #{tpu_custom_call.1} parent=1 // pred_check
      _
    $region31: #{tpu_custom_call.1} parent=1 // pred_check_branch
      %77 = sbr.rel (0) target = $region33
    $region32: #{tpu_custom_call.1} parent=1 // pred_region
      _
    $region33: #{tpu_custom_call.1} parent=1 // pred_fallthru
      _
    // Predicated region
    $region34: #{tpu_custom_call.1} parent=1 // pred_check
      _
    $region35: #{tpu_custom_call.1} parent=1 // pred_check_branch
      %79 = sbr.rel (0) target = $region37
    $region36: #{tpu_custom_call.1} parent=1 // pred_region
      %s81 = ssub.s32 16, 16
      %82 = vsyncadd [#allocation9], %s81
      %s84 = sshll.u32 [#allocation8], 4
      %s85 = int_to_ptr.vmem [resolvable:$true] %s84
      %87 = dma.hbm_to_vmem [thread:$0]  %s8, 16, %s85, [#allocation9]
    $region37: #{tpu_custom_call.1} parent=1 // pred_fallthru
      _
    // Predicated region
    $region38: #{tpu_custom_call.1} parent=1 // pred_check
      _
    $region39: #{tpu_custom_call.1} parent=1 // pred_check_branch
      %89 = sbr.rel (0) target = $region41
    $region40: #{tpu_custom_call.1} parent=1 // pred_region
      %s91 = ssub.s32 16, 16
      %92 = vsyncadd [#allocation9], %s91
      %s94 = sshll.u32 [#allocation10], 4
      %s95 = int_to_ptr.vmem [resolvable:$true] %s94
      %97 = dma.hbm_to_vmem [thread:$0]  %s9, 16, %s95, [#allocation9]
    $region41: #{tpu_custom_call.1} parent=1 // pred_fallthru
      _
    // Predicated region
    $region42: #{tpu_custom_call.1} parent=1 // pred_check
      _
    $region43: #{tpu_custom_call.1} parent=1 // pred_check_branch
      %99 = sbr.rel (0) target = $region45
    $region44: #{tpu_custom_call.1} parent=1 // pred_region
      _
    $region45: #{tpu_custom_call.1} parent=1 // pred_fallthru
      _
    // Predicated region
    $region46: #{tpu_custom_call.1} parent=1 // pred_check
      _
    $region47: #{tpu_custom_call.1} parent=1 // pred_check_branch
      %101 = sbr.rel (0) target = $region49
    $region48: #{tpu_custom_call.1} parent=1 // pred_region
      _
    $region49: #{tpu_custom_call.1} parent=1 // pred_fallthru
      _
    // Predicated region
    $region50: #{tpu_custom_call.1} parent=1 // pred_check
      _
    $region51: #{tpu_custom_call.1} parent=1 // pred_check_branch
      %103 = sbr.rel (0) target = $region53
    $region52: #{tpu_custom_call.1} parent=1 // pred_region
      _
    $region53: #{tpu_custom_call.1} parent=1 // pred_fallthru
      _
    // Predicated region
    $region54: #{tpu_custom_call.1} parent=1 // pred_check
      _
    $region55: #{tpu_custom_call.1} parent=1 // pred_check_branch
      %105 = sbr.rel (0) target = $region57
    $region56: #{tpu_custom_call.1} parent=1 // pred_region
      %s107 = ssub.s32 16, 16
      %108 = vsyncadd [#allocation12], %s107
      %s110 = sshll.u32 [#allocation11], 4
      %s111 = int_to_ptr.vmem [resolvable:$true] %s110
      %113 = dma.hbm_to_vmem [thread:$0]  %s13, 16, %s111, [#allocation12]
    $region57: #{tpu_custom_call.1} parent=1 // pred_fallthru
      _
    // Predicated region
    $region58: #{tpu_custom_call.1} parent=1 // pred_check
      _
    $region59: #{tpu_custom_call.1} parent=1 // pred_check_branch
      %115 = sbr.rel (0) target = $region61
    $region60: #{tpu_custom_call.1} parent=1 // pred_region
      _
    $region61: #{tpu_custom_call.1} parent=1 // pred_fallthru
      _
    // Predicated region
    $region62: #{tpu_custom_call.1} parent=1 // pred_check
      _
    $region63: #{tpu_custom_call.1} parent=1 // pred_check_branch
      %117 = sbr.rel (0) target = $region65
    $region64: #{tpu_custom_call.1} parent=1 // pred_region
      _
    $region65: #{tpu_custom_call.1} parent=1 // pred_fallthru
      _
    // Predicated region
    $region66: #{tpu_custom_call.1} parent=1 // pred_check
      _
    $region67: #{tpu_custom_call.1} parent=1 // pred_check_branch
      %119 = sbr.rel (0) target = $region69
    $region68: #{tpu_custom_call.1} parent=1 // pred_region
      %s121 = ssub.s32 16, 16
      %122 = vsyncadd [#allocation12], %s121
      %s124 = sshll.u32 [#allocation13], 4
      %s125 = int_to_ptr.vmem [resolvable:$true] %s124
      %127 = dma.hbm_to_vmem [thread:$0]  %s16, 16, %s125, [#allocation12]
    $region69: #{tpu_custom_call.1} parent=1 // pred_fallthru
      _
    // Predicated region
    $region70: #{tpu_custom_call.1} parent=1 // pred_check
      _
    $region71: #{tpu_custom_call.1} parent=1 // pred_check_branch
      %129 = sbr.rel (0) target = $region73
    $region72: #{tpu_custom_call.1} parent=1 // pred_region
      %s131 = ssub.s32 16, 16
      %132 = vsyncadd [#allocation15], %s131
      %s134 = sshll.u32 [#allocation14], 4
      %s135 = int_to_ptr.vmem [resolvable:$true] %s134
      %137 = dma.hbm_to_vmem [thread:$0]  %s17, 16, %s135, [#allocation15]
    $region73: #{tpu_custom_call.1} parent=1 // pred_fallthru
      _
    // Predicated region
    $region74: #{tpu_custom_call.1} parent=1 // pred_check
      _
    $region75: #{tpu_custom_call.1} parent=1 // pred_check_branch
      %139 = sbr.rel (0) target = $region77
    $region76: #{tpu_custom_call.1} parent=1 // pred_region
      _
    $region77: #{tpu_custom_call.1} parent=1 // pred_fallthru
      _
    // Predicated region
    $region78: #{tpu_custom_call.1} parent=1 // pred_check
      _
    $region79: #{tpu_custom_call.1} parent=1 // pred_check_branch
      %141 = sbr.rel (0) target = $region81
    $region80: #{tpu_custom_call.1} parent=1 // pred_region
      _
    $region81: #{tpu_custom_call.1} parent=1 // pred_fallthru
      _
    // Predicated region
    $region82: #{tpu_custom_call.1} parent=1 // pred_check
      _
    $region83: #{tpu_custom_call.1} parent=1 // pred_check_branch
      %143 = sbr.rel (0) target = $region85
    $region84: #{tpu_custom_call.1} parent=1 // pred_region
      _
    $region85: #{tpu_custom_call.1} parent=1 // pred_fallthru
      _
    // Predicated region
    $region86: #{tpu_custom_call.1} parent=1 // pred_check
      _
    $region87: #{tpu_custom_call.1} parent=1 // pred_check_branch
      %145 = sbr.rel (0) target = $region89
    $region88: #{tpu_custom_call.1} parent=1 // pred_region
      _
    $region89: #{tpu_custom_call.1} parent=1 // pred_fallthru
      _
    // Predicated region
    $region90: #{tpu_custom_call.1} parent=1 // pred_check
      _
    $region91: #{tpu_custom_call.1} parent=1 // pred_check_branch
      %147 = sbr.rel (0) target = $region93
    $region92: #{tpu_custom_call.1} parent=1 // pred_region
      _
    $region93: #{tpu_custom_call.1} parent=1 // pred_fallthru
      _
    // Predicated region
    $region94: #{tpu_custom_call.1} parent=1 // pred_check
      _
    $region95: #{tpu_custom_call.1} parent=1 // pred_check_branch
      %149 = sbr.rel (0) target = $region97
    $region96: #{tpu_custom_call.1} parent=1 // pred_region
      _
    $region97: #{tpu_custom_call.1} parent=1 // pred_fallthru
      _
    // Predicated region
    $region98: #{tpu_custom_call.1} parent=1 // pred_check
      _
    $region99: #{tpu_custom_call.1} parent=1 // pred_check_branch
      %151 = sbr.rel (0) target = $region101
    $region100: #{tpu_custom_call.1} parent=1 // pred_region
      %152 = dma.done [#allocation3], 128
    $region101: #{tpu_custom_call.1} parent=1 // pred_fallthru
      _
    // Predicated region
    $region102: #{tpu_custom_call.1} parent=1 // pred_check
      _
    $region103: #{tpu_custom_call.1} parent=1 // pred_check_branch
      %154 = sbr.rel (0) target = $region105
    $region104: #{tpu_custom_call.1} parent=1 // pred_region
      %155 = dma.done [#allocation6], 128
    $region105: #{tpu_custom_call.1} parent=1 // pred_fallthru
      _
    // Predicated region
    $region106: #{tpu_custom_call.1} parent=1 // pred_check
      _
    $region107: #{tpu_custom_call.1} parent=1 // pred_check_branch
      %157 = sbr.rel (0) target = $region109
    $region108: #{tpu_custom_call.1} parent=1 // pred_region
      %158 = dma.done [#allocation6], 16
    $region109: #{tpu_custom_call.1} parent=1 // pred_fallthru
      _
    // Predicated region
    $region110: #{tpu_custom_call.1} parent=1 // pred_check
      _
    $region111: #{tpu_custom_call.1} parent=1 // pred_check_branch
      %160 = sbr.rel (0) target = $region113
    $region112: #{tpu_custom_call.1} parent=1 // pred_region
      %161 = dma.done [#allocation9], 16
    $region113: #{tpu_custom_call.1} parent=1 // pred_fallthru
      _
    // Predicated region
    $region114: #{tpu_custom_call.1} parent=1 // pred_check
      _
    $region115: #{tpu_custom_call.1} parent=1 // pred_check_branch
      %163 = sbr.rel (0) target = $region117
    $region116: #{tpu_custom_call.1} parent=1 // pred_region
      %164 = dma.done [#allocation9], 16
    $region117: #{tpu_custom_call.1} parent=1 // pred_fallthru
      _
    // Predicated region
    $region118: #{tpu_custom_call.1} parent=1 // pred_check
      _
    $region119: #{tpu_custom_call.1} parent=1 // pred_check_branch
      %166 = sbr.rel (0) target = $region121
    $region120: #{tpu_custom_call.1} parent=1 // pred_region
      %167 = dma.done [#allocation12], 16
    $region121: #{tpu_custom_call.1} parent=1 // pred_fallthru
      _
    // Predicated region
    $region122: #{tpu_custom_call.1} parent=1 // pred_check
      _
    $region123: #{tpu_custom_call.1} parent=1 // pred_check_branch
      %169 = sbr.rel (0) target = $region125
    $region124: #{tpu_custom_call.1} parent=1 // pred_region
      %170 = dma.done [#allocation12], 16
    $region125: #{tpu_custom_call.1} parent=1 // pred_fallthru
      _
    // Predicated region
    $region126: #{tpu_custom_call.1} parent=1 // pred_check
      _
    $region127: #{tpu_custom_call.1} parent=1 // pred_check_branch
      %172 = sbr.rel (0) target = $region129
    $region128: #{tpu_custom_call.1} parent=1 // pred_region
      %173 = dma.done [#allocation15], 16
    $region129: #{tpu_custom_call.1} parent=1 // pred_fallthru
      _
    %v175 = vld [vmem:[#allocation2] sm:$0xff]
    %v176 = vld [vmem:[%s4] sm:$0xff]
    %v177 = vld [vmem:[%s4 + $0x8] sm:$0xff]
    %v178 = vpack.c.bf16 %v175, %v175
    %v179 = vpack.c.bf16 %v177, %v176
    %v180 = vld [vmem:[#allocation7] sm:$0x1]
    %v182 = vlaneseq
    %v183 = vshrl.u32 %v182, 7
    %v184 = vsub.s32 0, %v183
    %v185 = vrot.slane %v180, %v184
    %vm187 = vcmask 130048
    %v189 = vsel %vm187, %v178, 0
    %191 = vmatprep.subr.bf16.mxu0 0
    %192 = vmatpush1.bf16.msra.mxu0 0
    %193 = vmatprep.subr.bf16.mxu0 0
    %194 = vmatpush1.bf16.msra.mxu0 0
    %195 = vmatprep.subr.bf16.mxu0 0
    %196 = vmatpush1.bf16.msra.mxu0 0
    %197 = vmatprep.subr.bf16.mxu0 0
    %198 = vmatpush1.bf16.msra.mxu0 0
    %199 = vmatprep.subr.bf16.mxu0 0
    %200 = vmatpush1.bf16.msra.mxu0 0
    %201 = vmatprep.subr.bf16.mxu0 0
    %202 = vmatpush1.bf16.msra.mxu0 0
    %203 = vmatprep.subr.bf16.mxu0 0
    %204 = vmatpush1.bf16.msra.mxu0 0
    %205 = vmatprep.subr.bf16.mxu0 0
    %206 = vmatpush1.bf16.msra.mxu0 %v179
    %207 = vmatprep.subr.bf16.mxu0 0
    %208 = vmatpush2.bf16.msra.mxu0 0
    %209 = vmatprep.subr.bf16.mxu0 0
    %210 = vmatpush2.bf16.msra.mxu0 0
    %211 = vmatprep.subr.bf16.mxu0 0
    %212 = vmatpush2.bf16.msra.mxu0 0
    %213 = vmatprep.subr.bf16.mxu0 0
    %214 = vmatpush2.bf16.msra.mxu0 0
    %215 = vmatprep.subr.bf16.mxu0 0
    %216 = vmatpush2.bf16.msra.mxu0 0
    %217 = vmatprep.subr.bf16.mxu0 0
    %218 = vmatpush2.bf16.msra.mxu0 0
    %219 = vmatprep.subr.bf16.mxu0 0
    %220 = vmatpush2.bf16.msra.mxu0 0
    %221 = vmatprep.subr.bf16.mxu0 0
    %222 = vmatpush2.bf16.msra.mxu0 0
    %223 = vmatprep.mubr.bf16.mxu0 0
    %224 = vmatmul.mubr.bf16.gmra.mxu0 %v189
    %v225 = vpop.f32.mrf.mxu0
    %v226 = vadd.f32 %v185, %v225
    %v227 = vpop.f32.mrf.mxu0
    %v228 = vpop.f32.mrf.mxu0
    %v229 = vpop.f32.mrf.mxu0
    %230 = vdwg.mxu0
    %v231 = vmax.f32 %v226, 0.0
    %v232 = vld [vmem:[%s6] sm:$0xff]
    %v233 = vld [vmem:[%s6 + $0x8] sm:$0xff]
    %v234 = vld [vmem:[%s6 + $0x10] sm:$0xff]
    %v235 = vld [vmem:[%s6 + $0x18] sm:$0xff]
    %v236 = vpack.c.bf16 %v231, %v231
    %v237 = vpack.c.bf16 %v233, %v232
    %v238 = vpack.c.bf16 %v235, %v234
    %v239 = vld [vmem:[#allocation8] sm:$0x1]
    %v241 = vlaneseq
    %v242 = vshrl.u32 %v241, 7
    %v243 = vsub.s32 0, %v242
    %v244 = vrot.slane %v239, %v243
    %vm246 = vcmask 261120
    %v248 = vsel %vm246, %v236, 0
    %250 = vmatprep.subr.bf16.mxu0 0
    %251 = vmatpush1.bf16.msra.mxu0 0
    %252 = vmatprep.subr.bf16.mxu0 0
    %253 = vmatpush1.bf16.msra.mxu0 0
    %254 = vmatprep.subr.bf16.mxu0 0
    %255 = vmatpush1.bf16.msra.mxu0 0
    %256 = vmatprep.subr.bf16.mxu0 0
    %257 = vmatpush1.bf16.msra.mxu0 0
    %258 = vmatprep.subr.bf16.mxu0 0
    %259 = vmatpush1.bf16.msra.mxu0 0
    %260 = vmatprep.subr.bf16.mxu0 0
    %261 = vmatpush1.bf16.msra.mxu0 0
    %262 = vmatprep.subr.bf16.mxu0 0
    %263 = vmatpush1.bf16.msra.mxu0 %v238
    %264 = vmatprep.subr.bf16.mxu0 0
    %265 = vmatpush1.bf16.msra.mxu0 %v237
    %266 = vmatprep.subr.bf16.mxu0 0
    %267 = vmatpush2.bf16.msra.mxu0 0
    %268 = vmatprep.subr.bf16.mxu0 0
    %269 = vmatpush2.bf16.msra.mxu0 0
    %270 = vmatprep.subr.bf16.mxu0 0
    %271 = vmatpush2.bf16.msra.mxu0 0
    %272 = vmatprep.subr.bf16.mxu0 0
    %273 = vmatpush2.bf16.msra.mxu0 0
    %274 = vmatprep.subr.bf16.mxu0 0
    %275 = vmatpush2.bf16.msra.mxu0 0
    %276 = vmatprep.subr.bf16.mxu0 0
    %277 = vmatpush2.bf16.msra.mxu0 0
    %278 = vmatprep.subr.bf16.mxu0 0
    %279 = vmatpush2.bf16.msra.mxu0 0
    %280 = vmatprep.subr.bf16.mxu0 0
    %281 = vmatpush2.bf16.msra.mxu0 0
    %282 = vmatprep.mubr.bf16.mxu0 0
    %283 = vmatmul.mubr.bf16.gmra.mxu0 %v248
    %v284 = vpop.f32.mrf.mxu0
    %v285 = vadd.f32 %v244, %v284
    %v286 = vpop.f32.mrf.mxu0
    %v287 = vpop.f32.mrf.mxu0
    %v288 = vpop.f32.mrf.mxu0
    %289 = vdwg.mxu0
    %v290 = vld [vmem:[#allocation5] sm:$0xff]
    %v291 = vld [vmem:[%s7] sm:$0xff]
    %v292 = vld [vmem:[%s7 + $0x8] sm:$0xff]
    %v293 = vld [vmem:[%s7 + $0x10] sm:$0xff]
    %v294 = vld [vmem:[%s7 + $0x18] sm:$0xff]
    %v295 = vld [vmem:[#allocation10] sm:$0x1]
    %v296 = vpack.c.bf16 %v290, %v290
    %v297 = vpack.c.bf16 %v292, %v291
    %v298 = vpack.c.bf16 %v294, %v293
    %v300 = vlaneseq
    %v301 = vshrl.u32 %v300, 7
    %v302 = vsub.s32 0, %v301
    %v303 = vrot.slane %v295, %v302
    %v306 = vsel %vm246, %v296, 0
    %308 = vmatprep.subr.bf16.mxu0 0
    %309 = vmatpush1.bf16.msra.mxu0 0
    %310 = vmatprep.subr.bf16.mxu0 0
    %311 = vmatpush1.bf16.msra.mxu0 0
    %312 = vmatprep.subr.bf16.mxu0 0
    %313 = vmatpush1.bf16.msra.mxu0 0
    %314 = vmatprep.subr.bf16.mxu0 0
    %315 = vmatpush1.bf16.msra.mxu0 0
    %316 = vmatprep.subr.bf16.mxu0 0
    %317 = vmatpush1.bf16.msra.mxu0 0
    %318 = vmatprep.subr.bf16.mxu0 0
    %319 = vmatpush1.bf16.msra.mxu0 0
    %320 = vmatprep.subr.bf16.mxu0 0
    %321 = vmatpush1.bf16.msra.mxu0 %v298
    %322 = vmatprep.subr.bf16.mxu0 0
    %323 = vmatpush1.bf16.msra.mxu0 %v297
    %324 = vmatprep.subr.bf16.mxu0 0
    %325 = vmatpush2.bf16.msra.mxu0 0
    %326 = vmatprep.subr.bf16.mxu0 0
    %327 = vmatpush2.bf16.msra.mxu0 0
    %328 = vmatprep.subr.bf16.mxu0 0
    %329 = vmatpush2.bf16.msra.mxu0 0
    %330 = vmatprep.subr.bf16.mxu0 0
    %331 = vmatpush2.bf16.msra.mxu0 0
    %332 = vmatprep.subr.bf16.mxu0 0
    %333 = vmatpush2.bf16.msra.mxu0 0
    %334 = vmatprep.subr.bf16.mxu0 0
    %335 = vmatpush2.bf16.msra.mxu0 0
    %336 = vmatprep.subr.bf16.mxu0 0
    %337 = vmatpush2.bf16.msra.mxu0 0
    %338 = vmatprep.subr.bf16.mxu0 0
    %339 = vmatpush2.bf16.msra.mxu0 0
    %340 = vmatprep.mubr.bf16.mxu0 0
    %341 = vmatmul.mubr.bf16.gmra.mxu0 %v306
    %v342 = vpop.f32.mrf.mxu0
    %v343 = vadd.f32 %v303, %v342
    %v344 = vpop.f32.mrf.mxu0
    %v345 = vpop.f32.mrf.mxu0
    %v346 = vpop.f32.mrf.mxu0
    %347 = vdwg.mxu0
    %v348 = vadd.f32 %v285, %v343
    %v349 = vxor.u32 %v348, 2147483648
    %v350 = vmul.f32 %v349, 1.442695
    %v351 = vpow.pop %v350
    %v352 = vadd.f32 %v351, 1.0
    %v353 = vrcp.pop %v352
    %v354 = vmul.f32 1.0, %v353
    %356 = vrot.lane.b32.xlu0 %v343, 64
    %v357 = vpop.permute.xlu0 %356
    %v359 = vmul.f32 %v354, %v357
    %361 = vrot.lane.b32.xlu0 %v359, 64
    %v362 = vpop.permute.xlu0 %361
    %v364 = vadd.f32 %v285, %v362
    %v365 = vtanh.pop %v364
    %v366 = vsub.f32 1.0, %v354
    %368 = vrot.lane.b32.xlu0 %v365, 96
    %v369 = vpop.permute.xlu0 %368
    %v371 = vmul.f32 %v366, %v369
    %373 = vrot.lane.b32.xlu0 %v290, 32
    %v374 = vpop.permute.xlu0 %373
    %v376 = vmul.f32 %v354, %v374
    %v377 = vadd.f32 %v371, %v376
    %379 = vrot.lane.b32.xlu0 %v377, 96
    %v380 = vpop.permute.xlu0 %379
    %382 = vst.msk [vmem:[#allocation17] sm:$0xff] %vm246, %v380
    %v383 = vld [vmem:[%s3] sm:$0xff]
    %v384 = vld [vmem:[%s3 + $0x8] sm:$0xff]
    %v385 = vld [vmem:[%s3 + $0x10] sm:$0xff]
    %v386 = vpack.c.bf16 %v384, %v383
    %v387 = vpack.c.bf16 %v385, %v385
    %v388 = vpack.c.bf16 %v377, %v377
    %390 = vrot.lane.b32.xlu0 %v388, 96
    %v391 = vpop.permute.xlu0 %390
    %vm392 = vcmask 64512
    %v394 = vsel %vm392, %v386, 0
    %v397 = vsel %vm392, %v387, 0
    %vm399 = vcmask 1043456
    %v401 = vsel %vm399, %v391, 0
    %403 = vmatprep.subr.bf16.mxu0 0
    %404 = vmatpush1.bf16.msra.mxu0 0
    %405 = vmatprep.subr.bf16.mxu0 0
    %406 = vmatpush1.bf16.msra.mxu0 0
    %407 = vmatprep.subr.bf16.mxu0 0
    %408 = vmatpush1.bf16.msra.mxu0 0
    %409 = vmatprep.subr.bf16.mxu0 0
    %410 = vmatpush1.bf16.msra.mxu0 0
    %411 = vmatprep.subr.bf16.mxu0 0
    %412 = vmatpush1.bf16.msra.mxu0 0
    %413 = vmatprep.subr.bf16.mxu0 0
    %414 = vmatpush1.bf16.msra.mxu0 0
    %415 = vmatprep.subr.bf16.mxu0 0
    %416 = vmatpush1.bf16.msra.mxu0 0
    %417 = vmatprep.subr.bf16.mxu0 0
    %418 = vmatpush1.bf16.msra.mxu0 %v401
    %419 = vmatprep.subr.bf16.mxu0 0
    %420 = vmatpush2.bf16.msra.mxu0 0
    %421 = vmatprep.subr.bf16.mxu0 0
    %422 = vmatpush2.bf16.msra.mxu0 0
    %423 = vmatprep.subr.bf16.mxu0 0
    %424 = vmatpush2.bf16.msra.mxu0 0
    %425 = vmatprep.subr.bf16.mxu0 0
    %426 = vmatpush2.bf16.msra.mxu0 0
    %427 = vmatprep.subr.bf16.mxu0 0
    %428 = vmatpush2.bf16.msra.mxu0 0
    %429 = vmatprep.subr.bf16.mxu0 0
    %430 = vmatpush2.bf16.msra.mxu0 0
    %431 = vmatprep.subr.bf16.mxu0 0
    %432 = vmatpush2.bf16.msra.mxu0 0
    %433 = vmatprep.subr.bf16.mxu0 0
    %434 = vmatpush2.bf16.msra.mxu0 0
    %435 = vmatprep.mubr.bf16.mxu0 0
    %436 = vmatmul.mubr.bf16.gmra.mxu0 %v394
    %v437 = vpop.f32.mrf.mxu0
    %v438 = vadd.f32 0.0, %v437
    %v439 = vpop.f32.mrf.mxu0
    %v440 = vpop.f32.mrf.mxu0
    %v441 = vadd.f32 0.0, %v440
    %v442 = vpop.f32.mrf.mxu0
    %443 = vmatprep.mubr.bf16.mxu0 0
    %444 = vmatmul.mubr.bf16.gmra.mxu0 %v397
    %v445 = vpop.f32.mrf.mxu0
    %v446 = vadd.f32 0.0, %v445
    %v447 = vpop.f32.mrf.mxu0
    %v448 = vpop.f32.mrf.mxu0
    %v449 = vpop.f32.mrf.mxu0
    %450 = vdwg.mxu0
    %454 = vrot.lane.b32.xlu0 %v438, 32
    %v455 = vpop.permute.xlu0 %454
    %456 = vrot.lane.b32.xlu0 %v441, 32
    %v457 = vpop.permute.xlu0 %456
    %458 = vrot.lane.b32.xlu0 %v446, 32
    %v459 = vpop.permute.xlu0 %458
    %v463 = vsel %vm246, %v380, %v455
    %v464 = vsel %vm246, %v380, %v457
    %v465 = vsel %vm246, %v380, %v459
    %v466 = vld [vmem:[%s10] sm:$0xff]
    %v467 = vld [vmem:[%s10 + $0x8] sm:$0xff]
    %v468 = vld [vmem:[%s10 + $0x10] sm:$0xff]
    %v469 = vld [vmem:[%s10 + $0x18] sm:$0xff]
    %v470 = vld [vmem:[%s10 + $0x20] sm:$0xff]
    %v471 = vld [vmem:[%s10 + $0x28] sm:$0xff]
    %v472 = vld [vmem:[%s10 + $0x30] sm:$0xff]
    %v473 = vld [vmem:[%s10 + $0x38] sm:$0xff]
    %v474 = vpack.c.bf16 %v464, %v463
    %v475 = vpack.c.bf16 %v465, %v465
    %v476 = vpack.c.bf16 %v467, %v466
    %v477 = vpack.c.bf16 %v469, %v468
    %v478 = vpack.c.bf16 %v471, %v470
    %v479 = vpack.c.bf16 %v473, %v472
    %v480 = vld [vmem:[%s12] sm:$0x1]
    %v482 = vlaneseq
    %v483 = vshrl.u32 %v482, 7
    %v484 = vsub.s32 0, %v483
    %v485 = vrot.slane %v480, %v484
    %vm487 = vcmask 523264
    %v489 = vsel %vm487, %v474, 0
    %v492 = vsel %vm487, %v475, 0
    %494 = vmatprep.subr.bf16.mxu0 0
    %495 = vmatpush1.bf16.msra.mxu0 0
    %496 = vmatprep.subr.bf16.mxu0 0
    %497 = vmatpush1.bf16.msra.mxu0 0
    %498 = vmatprep.subr.bf16.mxu0 0
    %499 = vmatpush1.bf16.msra.mxu0 0
    %500 = vmatprep.subr.bf16.mxu0 0
    %501 = vmatpush1.bf16.msra.mxu0 0
    %502 = vmatprep.subr.bf16.mxu0 0
    %503 = vmatpush1.bf16.msra.mxu0 %v479
    %504 = vmatprep.subr.bf16.mxu0 0
    %505 = vmatpush1.bf16.msra.mxu0 %v478
    %506 = vmatprep.subr.bf16.mxu0 0
    %507 = vmatpush1.bf16.msra.mxu0 %v477
    %508 = vmatprep.subr.bf16.mxu0 0
    %509 = vmatpush1.bf16.msra.mxu0 %v476
    %510 = vmatprep.subr.bf16.mxu0 0
    %511 = vmatpush2.bf16.msra.mxu0 0
    %512 = vmatprep.subr.bf16.mxu0 0
    %513 = vmatpush2.bf16.msra.mxu0 0
    %514 = vmatprep.subr.bf16.mxu0 0
    %515 = vmatpush2.bf16.msra.mxu0 0
    %516 = vmatprep.subr.bf16.mxu0 0
    %517 = vmatpush2.bf16.msra.mxu0 0
    %518 = vmatprep.subr.bf16.mxu0 0
    %519 = vmatpush2.bf16.msra.mxu0 0
    %520 = vmatprep.subr.bf16.mxu0 0
    %521 = vmatpush2.bf16.msra.mxu0 0
    %522 = vmatprep.subr.bf16.mxu0 0
    %523 = vmatpush2.bf16.msra.mxu0 0
    %524 = vmatprep.subr.bf16.mxu0 0
    %525 = vmatpush2.bf16.msra.mxu0 0
    %526 = vmatprep.mubr.bf16.mxu0 0
    %527 = vmatmul.mubr.bf16.gmra.mxu0 %v489
    %v528 = vpop.f32.mrf.mxu0
    %v529 = vadd.f32 %v485, %v528
    %v530 = vpop.f32.mrf.mxu0
    %v531 = vpop.f32.mrf.mxu0
    %v532 = vadd.f32 %v485, %v531
    %v533 = vpop.f32.mrf.mxu0
    %534 = vmatprep.mubr.bf16.mxu0 0
    %535 = vmatmul.mubr.bf16.gmra.mxu0 %v492
    %v536 = vpop.f32.mrf.mxu0
    %v537 = vadd.f32 %v485, %v536
    %v538 = vpop.f32.mrf.mxu0
    %v539 = vpop.f32.mrf.mxu0
    %v540 = vpop.f32.mrf.mxu0
    %541 = vdwg.mxu0
    %v542 = vld [vmem:[%s14] sm:$0xff]
    %v543 = vld [vmem:[%s14 + $0x8] sm:$0xff]
    %v544 = vld [vmem:[%s14 + $0x10] sm:$0xff]
    %v545 = vld [vmem:[%s14 + $0x18] sm:$0xff]
    %v546 = vld [vmem:[%s14 + $0x20] sm:$0xff]
    %v547 = vld [vmem:[%s14 + $0x28] sm:$0xff]
    %v548 = vld [vmem:[%s14 + $0x30] sm:$0xff]
    %v549 = vld [vmem:[%s14 + $0x38] sm:$0xff]
    %v550 = vpack.c.bf16 %v543, %v542
    %v551 = vpack.c.bf16 %v545, %v544
    %v552 = vpack.c.bf16 %v547, %v546
    %v553 = vpack.c.bf16 %v549, %v548
    %v554 = vld [vmem:[#allocation13] sm:$0x1]
    %v556 = vlaneseq
    %v557 = vshrl.u32 %v556, 7
    %v558 = vsub.s32 0, %v557
    %v559 = vrot.slane %v554, %v558
    %561 = vmatprep.subr.bf16.mxu0 0
    %562 = vmatpush1.bf16.msra.mxu0 0
    %563 = vmatprep.subr.bf16.mxu0 0
    %564 = vmatpush1.bf16.msra.mxu0 0
    %565 = vmatprep.subr.bf16.mxu0 0
    %566 = vmatpush1.bf16.msra.mxu0 0
    %567 = vmatprep.subr.bf16.mxu0 0
    %568 = vmatpush1.bf16.msra.mxu0 0
    %569 = vmatprep.subr.bf16.mxu0 0
    %570 = vmatpush1.bf16.msra.mxu0 %v553
    %571 = vmatprep.subr.bf16.mxu0 0
    %572 = vmatpush1.bf16.msra.mxu0 %v552
    %573 = vmatprep.subr.bf16.mxu0 0
    %574 = vmatpush1.bf16.msra.mxu0 %v551
    %575 = vmatprep.subr.bf16.mxu0 0
    %576 = vmatpush1.bf16.msra.mxu0 %v550
    %577 = vmatprep.subr.bf16.mxu0 0
    %578 = vmatpush2.bf16.msra.mxu0 0
    %579 = vmatprep.subr.bf16.mxu0 0
    %580 = vmatpush2.bf16.msra.mxu0 0
    %581 = vmatprep.subr.bf16.mxu0 0
    %582 = vmatpush2.bf16.msra.mxu0 0
    %583 = vmatprep.subr.bf16.mxu0 0
    %584 = vmatpush2.bf16.msra.mxu0 0
    %585 = vmatprep.subr.bf16.mxu0 0
    %586 = vmatpush2.bf16.msra.mxu0 0
    %587 = vmatprep.subr.bf16.mxu0 0
    %588 = vmatpush2.bf16.msra.mxu0 0
    %589 = vmatprep.subr.bf16.mxu0 0
    %590 = vmatpush2.bf16.msra.mxu0 0
    %591 = vmatprep.subr.bf16.mxu0 0
    %592 = vmatpush2.bf16.msra.mxu0 0
    %593 = vmatprep.mubr.bf16.mxu0 0
    %594 = vmatmul.mubr.bf16.gmra.mxu0 %v489
    %v595 = vpop.f32.mrf.mxu0
    %v596 = vadd.f32 %v559, %v595
    %v597 = vpop.f32.mrf.mxu0
    %v598 = vpop.f32.mrf.mxu0
    %v599 = vadd.f32 %v559, %v598
    %v600 = vpop.f32.mrf.mxu0
    %601 = vmatprep.mubr.bf16.mxu0 0
    %602 = vmatmul.mubr.bf16.gmra.mxu0 %v492
    %v603 = vpop.f32.mrf.mxu0
    %v604 = vadd.f32 %v559, %v603
    %v605 = vpop.f32.mrf.mxu0
    %v606 = vpop.f32.mrf.mxu0
    %v607 = vpop.f32.mrf.mxu0
    %608 = vdwg.mxu0
    %v609 = vld [vmem:[%s11] sm:$0xff]
    %v610 = vld [vmem:[%s11 + $0x8] sm:$0xff]
    %v611 = vld [vmem:[%s11 + $0x10] sm:$0xff]
    %v612 = vld [vmem:[%s11 + $0x18] sm:$0xff]
    %v613 = vpack.c.bf16 %v610, %v609
    %v614 = vpack.c.bf16 %v612, %v611
    %v615 = vld [vmem:[%s15] sm:$0xff]
    %v616 = vld [vmem:[%s15 + $0x8] sm:$0xff]
    %v617 = vld [vmem:[%s15 + $0x10] sm:$0xff]
    %v618 = vld [vmem:[%s15 + $0x18] sm:$0xff]
    %v619 = vpack.c.bf16 %v616, %v615
    %v620 = vpack.c.bf16 %v618, %v617
    %v621 = vld [vmem:[#allocation11] sm:$0x1]
    %v623 = vlaneseq
    %v624 = vshrl.u32 %v623, 7
    %v625 = vsub.s32 0, %v624
    %v626 = vrot.slane %v621, %v625
    %v628 = vld [vmem:[#allocation14] sm:$0x1]
    %v630 = vlaneseq
    %v631 = vshrl.u32 %v630, 7
    %v632 = vsub.s32 0, %v631
    %v633 = vrot.slane %v628, %v632
    %v636 = vsel %vm246, 0, 0
    %638 = vmatprep.subr.bf16.mxu0 0
    %639 = vmatpush1.bf16.msra.mxu0 0
    %640 = vmatprep.subr.bf16.mxu0 0
    %641 = vmatpush1.bf16.msra.mxu0 0
    %642 = vmatprep.subr.bf16.mxu0 0
    %643 = vmatpush1.bf16.msra.mxu0 0
    %644 = vmatprep.subr.bf16.mxu0 0
    %645 = vmatpush1.bf16.msra.mxu0 0
    %646 = vmatprep.subr.bf16.mxu0 0
    %647 = vmatpush1.bf16.msra.mxu0 0
    %648 = vmatprep.subr.bf16.mxu0 0
    %649 = vmatpush1.bf16.msra.mxu0 0
    %650 = vmatprep.subr.bf16.mxu0 0
    %651 = vmatpush1.bf16.msra.mxu0 %v614
    %652 = vmatprep.subr.bf16.mxu0 0
    %653 = vmatpush1.bf16.msra.mxu0 %v613
    %654 = vmatprep.subr.bf16.mxu0 0
    %655 = vmatpush2.bf16.msra.mxu0 0
    %656 = vmatprep.subr.bf16.mxu0 0
    %657 = vmatpush2.bf16.msra.mxu0 0
    %658 = vmatprep.subr.bf16.mxu0 0
    %659 = vmatpush2.bf16.msra.mxu0 0
    %660 = vmatprep.subr.bf16.mxu0 0
    %661 = vmatpush2.bf16.msra.mxu0 0
    %662 = vmatprep.subr.bf16.mxu0 0
    %663 = vmatpush2.bf16.msra.mxu0 0
    %664 = vmatprep.subr.bf16.mxu0 0
    %665 = vmatpush2.bf16.msra.mxu0 0
    %666 = vmatprep.subr.bf16.mxu0 0
    %667 = vmatpush2.bf16.msra.mxu0 0
    %668 = vmatprep.subr.bf16.mxu0 0
    %669 = vmatpush2.bf16.msra.mxu0 0
    %670 = vmatprep.mubr.bf16.mxu0 0
    %671 = vmatmul.mubr.bf16.gmra.mxu0 %v636
    %v672 = vpop.f32.mrf.mxu0
    %v673 = vadd.f32 %v626, %v672
    %v674 = vpop.f32.mrf.mxu0
    %v675 = vpop.f32.mrf.mxu0
    %v676 = vpop.f32.mrf.mxu0
    %677 = vdwg.mxu0
    %v678 = vadd.f32 %v529, %v673
    %v679 = vxor.u32 %v678, 2147483648
    %v680 = vmul.f32 %v679, 1.442695
    %v681 = vpow.pop %v680
    %v682 = vadd.f32 %v681, 1.0
    %v683 = vrcp.pop %v682
    %v684 = vmul.f32 1.0, %v683
    %686 = vrot.lane.b32.xlu0 %v673, 64
    %v687 = vpop.permute.xlu0 %686
    %v689 = vmul.f32 %v684, %v687
    %691 = vrot.lane.b32.xlu0 %v689, 64
    %v692 = vpop.permute.xlu0 %691
    %v694 = vadd.f32 %v529, %v692
    %v695 = vtanh.pop %v694
    %v696 = vsub.f32 1.0, %v684
    %698 = vrot.lane.b32.xlu0 %v695, 96
    %v699 = vpop.permute.xlu0 %698
    %v701 = vmul.f32 %v696, %v699
    %v702 = vmul.f32 %v684, 0.0
    %v703 = vadd.f32 %v701, %v702
    %v704 = vpack.c.bf16 %v703, %v703
    %706 = vrot.lane.b32.xlu0 %v704, 96
    %v707 = vpop.permute.xlu0 %706
    %v709 = vsel %vm246, %v707, 0
    %711 = vmatprep.subr.bf16.mxu0 0
    %712 = vmatpush1.bf16.msra.mxu0 0
    %713 = vmatprep.subr.bf16.mxu0 0
    %714 = vmatpush1.bf16.msra.mxu0 0
    %715 = vmatprep.subr.bf16.mxu0 0
    %716 = vmatpush1.bf16.msra.mxu0 0
    %717 = vmatprep.subr.bf16.mxu0 0
    %718 = vmatpush1.bf16.msra.mxu0 0
    %719 = vmatprep.subr.bf16.mxu0 0
    %720 = vmatpush1.bf16.msra.mxu0 0
    %721 = vmatprep.subr.bf16.mxu0 0
    %722 = vmatpush1.bf16.msra.mxu0 0
    %723 = vmatprep.subr.bf16.mxu0 0
    %724 = vmatpush1.bf16.msra.mxu0 %v614
    %725 = vmatprep.subr.bf16.mxu0 0
    %726 = vmatpush1.bf16.msra.mxu0 %v613
    %727 = vmatprep.subr.bf16.mxu0 0
    %728 = vmatpush2.bf16.msra.mxu0 0
    %729 = vmatprep.subr.bf16.mxu0 0
    %730 = vmatpush2.bf16.msra.mxu0 0
    %731 = vmatprep.subr.bf16.mxu0 0
    %732 = vmatpush2.bf16.msra.mxu0 0
    %733 = vmatprep.subr.bf16.mxu0 0
    %734 = vmatpush2.bf16.msra.mxu0 0
    %735 = vmatprep.subr.bf16.mxu0 0
    %736 = vmatpush2.bf16.msra.mxu0 0
    %737 = vmatprep.subr.bf16.mxu0 0
    %738 = vmatpush2.bf16.msra.mxu0 0
    %739 = vmatprep.subr.bf16.mxu0 0
    %740 = vmatpush2.bf16.msra.mxu0 0
    %741 = vmatprep.subr.bf16.mxu0 0
    %742 = vmatpush2.bf16.msra.mxu0 0
    %743 = vmatprep.mubr.bf16.mxu0 0
    %744 = vmatmul.mubr.bf16.gmra.mxu0 %v709
    %v745 = vpop.f32.mrf.mxu0
    %v746 = vadd.f32 %v626, %v745
    %v747 = vpop.f32.mrf.mxu0
    %v748 = vpop.f32.mrf.mxu0
    %v749 = vpop.f32.mrf.mxu0
    %750 = vdwg.mxu0
    %v751 = vadd.f32 %v532, %v746
    %v752 = vxor.u32 %v751, 2147483648
    %v753 = vmul.f32 %v752, 1.442695
    %v754 = vpow.pop %v753
    %v755 = vadd.f32 %v754, 1.0
    %v756 = vrcp.pop %v755
    %v757 = vmul.f32 1.0, %v756
    %759 = vrot.lane.b32.xlu0 %v746, 64
    %v760 = vpop.permute.xlu0 %759
    %v762 = vmul.f32 %v757, %v760
    %764 = vrot.lane.b32.xlu0 %v762, 64
    %v765 = vpop.permute.xlu0 %764
    %v767 = vadd.f32 %v532, %v765
    %v768 = vtanh.pop %v767
    %v769 = vsub.f32 1.0, %v757
    %771 = vrot.lane.b32.xlu0 %v768, 96
    %v772 = vpop.permute.xlu0 %771
    %v774 = vmul.f32 %v769, %v772
    %v775 = vmul.f32 %v757, %v703
    %v776 = vadd.f32 %v774, %v775
    %v777 = vpack.c.bf16 %v776, %v776
    %779 = vrot.lane.b32.xlu0 %v777, 96
    %v780 = vpop.permute.xlu0 %779
    %v782 = vsel %vm246, %v780, 0
    %784 = vmatprep.subr.bf16.mxu0 0
    %785 = vmatpush1.bf16.msra.mxu0 0
    %786 = vmatprep.subr.bf16.mxu0 0
    %787 = vmatpush1.bf16.msra.mxu0 0
    %788 = vmatprep.subr.bf16.mxu0 0
    %789 = vmatpush1.bf16.msra.mxu0 0
    %790 = vmatprep.subr.bf16.mxu0 0
    %791 = vmatpush1.bf16.msra.mxu0 0
    %792 = vmatprep.subr.bf16.mxu0 0
    %793 = vmatpush1.bf16.msra.mxu0 0
    %794 = vmatprep.subr.bf16.mxu0 0
    %795 = vmatpush1.bf16.msra.mxu0 0
    %796 = vmatprep.subr.bf16.mxu0 0
    %797 = vmatpush1.bf16.msra.mxu0 %v614
    %798 = vmatprep.subr.bf16.mxu0 0
    %799 = vmatpush1.bf16.msra.mxu0 %v613
    %800 = vmatprep.subr.bf16.mxu0 0
    %801 = vmatpush2.bf16.msra.mxu0 0
    %802 = vmatprep.subr.bf16.mxu0 0
    %803 = vmatpush2.bf16.msra.mxu0 0
    %804 = vmatprep.subr.bf16.mxu0 0
    %805 = vmatpush2.bf16.msra.mxu0 0
    %806 = vmatprep.subr.bf16.mxu0 0
    %807 = vmatpush2.bf16.msra.mxu0 0
    %808 = vmatprep.subr.bf16.mxu0 0
    %809 = vmatpush2.bf16.msra.mxu0 0
    %810 = vmatprep.subr.bf16.mxu0 0
    %811 = vmatpush2.bf16.msra.mxu0 0
    %812 = vmatprep.subr.bf16.mxu0 0
    %813 = vmatpush2.bf16.msra.mxu0 0
    %814 = vmatprep.subr.bf16.mxu0 0
    %815 = vmatpush2.bf16.msra.mxu0 0
    %816 = vmatprep.mubr.bf16.mxu0 0
    %817 = vmatmul.mubr.bf16.gmra.mxu0 %v782
    %v818 = vpop.f32.mrf.mxu0
    %v819 = vadd.f32 %v626, %v818
    %v820 = vpop.f32.mrf.mxu0
    %v821 = vpop.f32.mrf.mxu0
    %v822 = vpop.f32.mrf.mxu0
    %823 = vdwg.mxu0
    %v824 = vadd.f32 %v537, %v819
    %v825 = vxor.u32 %v824, 2147483648
    %v826 = vmul.f32 %v825, 1.442695
    %v827 = vpow.pop %v826
    %v828 = vadd.f32 %v827, 1.0
    %v829 = vrcp.pop %v828
    %v830 = vmul.f32 1.0, %v829
    %832 = vrot.lane.b32.xlu0 %v819, 64
    %v833 = vpop.permute.xlu0 %832
    %v835 = vmul.f32 %v830, %v833
    %837 = vrot.lane.b32.xlu0 %v835, 64
    %v838 = vpop.permute.xlu0 %837
    %v840 = vadd.f32 %v537, %v838
    %v841 = vtanh.pop %v840
    %v842 = vsub.f32 1.0, %v830
    %844 = vrot.lane.b32.xlu0 %v841, 96
    %v845 = vpop.permute.xlu0 %844
    %v847 = vmul.f32 %v842, %v845
    %v848 = vmul.f32 %v830, %v776
    %v849 = vadd.f32 %v847, %v848
    %850 = vmatprep.subr.bf16.mxu0 0
    %851 = vmatpush1.bf16.msra.mxu0 0
    %852 = vmatprep.subr.bf16.mxu0 0
    %853 = vmatpush1.bf16.msra.mxu0 0
    %854 = vmatprep.subr.bf16.mxu0 0
    %855 = vmatpush1.bf16.msra.mxu0 0
    %856 = vmatprep.subr.bf16.mxu0 0
    %857 = vmatpush1.bf16.msra.mxu0 0
    %858 = vmatprep.subr.bf16.mxu0 0
    %859 = vmatpush1.bf16.msra.mxu0 0
    %860 = vmatprep.subr.bf16.mxu0 0
    %861 = vmatpush1.bf16.msra.mxu0 0
    %862 = vmatprep.subr.bf16.mxu0 0
    %863 = vmatpush1.bf16.msra.mxu0 %v620
    %864 = vmatprep.subr.bf16.mxu0 0
    %865 = vmatpush1.bf16.msra.mxu0 %v619
    %866 = vmatprep.subr.bf16.mxu0 0
    %867 = vmatpush2.bf16.msra.mxu0 0
    %868 = vmatprep.subr.bf16.mxu0 0
    %869 = vmatpush2.bf16.msra.mxu0 0
    %870 = vmatprep.subr.bf16.mxu0 0
    %871 = vmatpush2.bf16.msra.mxu0 0
    %872 = vmatprep.subr.bf16.mxu0 0
    %873 = vmatpush2.bf16.msra.mxu0 0
    %874 = vmatprep.subr.bf16.mxu0 0
    %875 = vmatpush2.bf16.msra.mxu0 0
    %876 = vmatprep.subr.bf16.mxu0 0
    %877 = vmatpush2.bf16.msra.mxu0 0
    %878 = vmatprep.subr.bf16.mxu0 0
    %879 = vmatpush2.bf16.msra.mxu0 0
    %880 = vmatprep.subr.bf16.mxu0 0
    %881 = vmatpush2.bf16.msra.mxu0 0
    %882 = vmatprep.mubr.bf16.mxu0 0
    %883 = vmatmul.mubr.bf16.gmra.mxu0 %v636
    %v884 = vpop.f32.mrf.mxu0
    %v885 = vadd.f32 %v633, %v884
    %v886 = vpop.f32.mrf.mxu0
    %v887 = vpop.f32.mrf.mxu0
    %v888 = vpop.f32.mrf.mxu0
    %889 = vdwg.mxu0
    %v890 = vadd.f32 %v604, %v885
    %v891 = vxor.u32 %v890, 2147483648
    %v892 = vmul.f32 %v891, 1.442695
    %v893 = vpow.pop %v892
    %v894 = vadd.f32 %v893, 1.0
    %v895 = vrcp.pop %v894
    %v896 = vmul.f32 1.0, %v895
    %898 = vrot.lane.b32.xlu0 %v885, 64
    %v899 = vpop.permute.xlu0 %898
    %v901 = vmul.f32 %v896, %v899
    %903 = vrot.lane.b32.xlu0 %v901, 64
    %v904 = vpop.permute.xlu0 %903
    %v906 = vadd.f32 %v604, %v904
    %v907 = vtanh.pop %v906
    %v908 = vsub.f32 1.0, %v896
    %910 = vrot.lane.b32.xlu0 %v907, 96
    %v911 = vpop.permute.xlu0 %910
    %v913 = vmul.f32 %v908, %v911
    %v914 = vmul.f32 %v896, 0.0
    %v915 = vadd.f32 %v913, %v914
    %v916 = vpack.c.bf16 %v915, %v915
    %918 = vrot.lane.b32.xlu0 %v916, 96
    %v919 = vpop.permute.xlu0 %918
    %v921 = vsel %vm246, %v919, 0
    %923 = vmatprep.subr.bf16.mxu0 0
    %924 = vmatpush1.bf16.msra.mxu0 0
    %925 = vmatprep.subr.bf16.mxu0 0
    %926 = vmatpush1.bf16.msra.mxu0 0
    %927 = vmatprep.subr.bf16.mxu0 0
    %928 = vmatpush1.bf16.msra.mxu0 0
    %929 = vmatprep.subr.bf16.mxu0 0
    %930 = vmatpush1.bf16.msra.mxu0 0
    %931 = vmatprep.subr.bf16.mxu0 0
    %932 = vmatpush1.bf16.msra.mxu0 0
    %933 = vmatprep.subr.bf16.mxu0 0
    %934 = vmatpush1.bf16.msra.mxu0 0
    %935 = vmatprep.subr.bf16.mxu0 0
    %936 = vmatpush1.bf16.msra.mxu0 %v620
    %937 = vmatprep.subr.bf16.mxu0 0
    %938 = vmatpush1.bf16.msra.mxu0 %v619
    %939 = vmatprep.subr.bf16.mxu0 0
    %940 = vmatpush2.bf16.msra.mxu0 0
    %941 = vmatprep.subr.bf16.mxu0 0
    %942 = vmatpush2.bf16.msra.mxu0 0
    %943 = vmatprep.subr.bf16.mxu0 0
    %944 = vmatpush2.bf16.msra.mxu0 0
    %945 = vmatprep.subr.bf16.mxu0 0
    %946 = vmatpush2.bf16.msra.mxu0 0
    %947 = vmatprep.subr.bf16.mxu0 0
    %948 = vmatpush2.bf16.msra.mxu0 0
    %949 = vmatprep.subr.bf16.mxu0 0
    %950 = vmatpush2.bf16.msra.mxu0 0
    %951 = vmatprep.subr.bf16.mxu0 0
    %952 = vmatpush2.bf16.msra.mxu0 0
    %953 = vmatprep.subr.bf16.mxu0 0
    %954 = vmatpush2.bf16.msra.mxu0 0
    %955 = vmatprep.mubr.bf16.mxu0 0
    %956 = vmatmul.mubr.bf16.gmra.mxu0 %v921
    %v957 = vpop.f32.mrf.mxu0
    %v958 = vadd.f32 %v633, %v957
    %v959 = vpop.f32.mrf.mxu0
    %v960 = vpop.f32.mrf.mxu0
    %v961 = vpop.f32.mrf.mxu0
    %962 = vdwg.mxu0
    %v963 = vadd.f32 %v599, %v958
    %v964 = vxor.u32 %v963, 2147483648
    %v965 = vmul.f32 %v964, 1.442695
    %v966 = vpow.pop %v965
    %v967 = vadd.f32 %v966, 1.0
    %v968 = vrcp.pop %v967
    %v969 = vmul.f32 1.0, %v968
    %971 = vrot.lane.b32.xlu0 %v958, 64
    %v972 = vpop.permute.xlu0 %971
    %v974 = vmul.f32 %v969, %v972
    %976 = vrot.lane.b32.xlu0 %v974, 64
    %v977 = vpop.permute.xlu0 %976
    %v979 = vadd.f32 %v599, %v977
    %v980 = vtanh.pop %v979
    %v981 = vsub.f32 1.0, %v969
    %983 = vrot.lane.b32.xlu0 %v980, 96
    %v984 = vpop.permute.xlu0 %983
    %v986 = vmul.f32 %v981, %v984
    %v987 = vmul.f32 %v969, %v915
    %v988 = vadd.f32 %v986, %v987
    %v989 = vpack.c.bf16 %v988, %v988
    %991 = vrot.lane.b32.xlu0 %v989, 96
    %v992 = vpop.permute.xlu0 %991
    %v994 = vsel %vm246, %v992, 0
    %996 = vmatprep.subr.bf16.mxu0 0
    %997 = vmatpush1.bf16.msra.mxu0 0
    %998 = vmatprep.subr.bf16.mxu0 0
    %999 = vmatpush1.bf16.msra.mxu0 0
    %1000 = vmatprep.subr.bf16.mxu0 0
    %1001 = vmatpush1.bf16.msra.mxu0 0
    %1002 = vmatprep.subr.bf16.mxu0 0
    %1003 = vmatpush1.bf16.msra.mxu0 0
    %1004 = vmatprep.subr.bf16.mxu0 0
    %1005 = vmatpush1.bf16.msra.mxu0 0
    %1006 = vmatprep.subr.bf16.mxu0 0
    %1007 = vmatpush1.bf16.msra.mxu0 0
    %1008 = vmatprep.subr.bf16.mxu0 0
    %1009 = vmatpush1.bf16.msra.mxu0 %v620
    %1010 = vmatprep.subr.bf16.mxu0 0
    %1011 = vmatpush1.bf16.msra.mxu0 %v619
    %1012 = vmatprep.subr.bf16.mxu0 0
    %1013 = vmatpush2.bf16.msra.mxu0 0
    %1014 = vmatprep.subr.bf16.mxu0 0
    %1015 = vmatpush2.bf16.msra.mxu0 0
    %1016 = vmatprep.subr.bf16.mxu0 0
    %1017 = vmatpush2.bf16.msra.mxu0 0
    %1018 = vmatprep.subr.bf16.mxu0 0
    %1019 = vmatpush2.bf16.msra.mxu0 0
    %1020 = vmatprep.subr.bf16.mxu0 0
    %1021 = vmatpush2.bf16.msra.mxu0 0
    %1022 = vmatprep.subr.bf16.mxu0 0
    %1023 = vmatpush2.bf16.msra.mxu0 0
    %1024 = vmatprep.subr.bf16.mxu0 0
    %1025 = vmatpush2.bf16.msra.mxu0 0
    %1026 = vmatprep.subr.bf16.mxu0 0
    %1027 = vmatpush2.bf16.msra.mxu0 0
    %1028 = vmatprep.mubr.bf16.mxu0 0
    %1029 = vmatmul.mubr.bf16.gmra.mxu0 %v994
    %v1030 = vpop.f32.mrf.mxu0
    %v1031 = vadd.f32 %v633, %v1030
    %v1032 = vpop.f32.mrf.mxu0
    %v1033 = vpop.f32.mrf.mxu0
    %v1034 = vpop.f32.mrf.mxu0
    %1035 = vdwg.mxu0
    %v1036 = vadd.f32 %v596, %v1031
    %v1037 = vxor.u32 %v1036, 2147483648
    %v1038 = vmul.f32 %v1037, 1.442695
    %v1039 = vpow.pop %v1038
    %v1040 = vadd.f32 %v1039, 1.0
    %v1041 = vrcp.pop %v1040
    %v1042 = vmul.f32 1.0, %v1041
    %1044 = vrot.lane.b32.xlu0 %v1031, 64
    %v1045 = vpop.permute.xlu0 %1044
    %v1047 = vmul.f32 %v1042, %v1045
    %1049 = vrot.lane.b32.xlu0 %v1047, 64
    %v1050 = vpop.permute.xlu0 %1049
    %v1052 = vadd.f32 %v596, %v1050
    %v1053 = vtanh.pop %v1052
    %v1054 = vsub.f32 1.0, %v1042
    %1056 = vrot.lane.b32.xlu0 %v1053, 96
    %v1057 = vpop.permute.xlu0 %1056
    %v1059 = vmul.f32 %v1054, %v1057
    %v1060 = vmul.f32 %v1042, %v988
    %v1061 = vadd.f32 %v1059, %v1060
    %1063 = vrot.lane.b32.xlu0 %v703, 96
    %v1064 = vpop.permute.xlu0 %1063
    %v1066 = vsel %vm246, %v1064, %v1061
    %1068 = vrot.lane.b32.xlu0 %v776, 96
    %v1069 = vpop.permute.xlu0 %1068
    %v1071 = vsel %vm246, %v1069, %v988
    %1073 = vrot.lane.b32.xlu0 %v849, 96
    %v1074 = vpop.permute.xlu0 %1073
    %v1076 = vsel %vm246, %v1074, %v915
    %v1077 = vld [vmem:[%s18] sm:$0xff]
    %v1078 = vld [vmem:[%s18 + $0x8] sm:$0xff]
    %v1079 = vld [vmem:[%s18 + $0x10] sm:$0xff]
    %v1080 = vld [vmem:[%s18 + $0x18] sm:$0xff]
    %v1081 = vld [vmem:[%s18 + $0x20] sm:$0xff]
    %v1082 = vld [vmem:[%s18 + $0x28] sm:$0xff]
    %v1083 = vld [vmem:[%s18 + $0x30] sm:$0xff]
    %v1084 = vld [vmem:[%s18 + $0x38] sm:$0xff]
    %v1085 = vpack.c.bf16 %v1071, %v1066
    %v1086 = vpack.c.bf16 %v1076, %v1076
    %v1087 = vpack.c.bf16 %v1078, %v1077
    %v1088 = vpack.c.bf16 %v1080, %v1079
    %v1089 = vpack.c.bf16 %v1082, %v1081
    %v1090 = vpack.c.bf16 %v1084, %v1083
    %v1091 = vld [vmem:[%s19] sm:$0x1]
    %v1093 = vlaneseq
    %v1094 = vshrl.u32 %v1093, 7
    %v1095 = vsub.s32 0, %v1094
    %v1096 = vrot.slane %v1091, %v1095
    %v1099 = vsel %vm487, %v1085, 0
    %v1102 = vsel %vm487, %v1086, 0
    %1104 = vmatprep.subr.bf16.mxu0 0
    %1105 = vmatpush1.bf16.msra.mxu0 0
    %1106 = vmatprep.subr.bf16.mxu0 0
    %1107 = vmatpush1.bf16.msra.mxu0 0
    %1108 = vmatprep.subr.bf16.mxu0 0
    %1109 = vmatpush1.bf16.msra.mxu0 0
    %1110 = vmatprep.subr.bf16.mxu0 0
    %1111 = vmatpush1.bf16.msra.mxu0 0
    %1112 = vmatprep.subr.bf16.mxu0 0
    %1113 = vmatpush1.bf16.msra.mxu0 %v1090
    %1114 = vmatprep.subr.bf16.mxu0 0
    %1115 = vmatpush1.bf16.msra.mxu0 %v1089
    %1116 = vmatprep.subr.bf16.mxu0 0
    %1117 = vmatpush1.bf16.msra.mxu0 %v1088
    %1118 = vmatprep.subr.bf16.mxu0 0
    %1119 = vmatpush1.bf16.msra.mxu0 %v1087
    %1120 = vmatprep.subr.bf16.mxu0 0
    %1121 = vmatpush2.bf16.msra.mxu0 0
    %1122 = vmatprep.subr.bf16.mxu0 0
    %1123 = vmatpush2.bf16.msra.mxu0 0
    %1124 = vmatprep.subr.bf16.mxu0 0
    %1125 = vmatpush2.bf16.msra.mxu0 0
    %1126 = vmatprep.subr.bf16.mxu0 0
    %1127 = vmatpush2.bf16.msra.mxu0 0
    %1128 = vmatprep.subr.bf16.mxu0 0
    %1129 = vmatpush2.bf16.msra.mxu0 0
    %1130 = vmatprep.subr.bf16.mxu0 0
    %1131 = vmatpush2.bf16.msra.mxu0 0
    %1132 = vmatprep.subr.bf16.mxu0 0
    %1133 = vmatpush2.bf16.msra.mxu0 0
    %1134 = vmatprep.subr.bf16.mxu0 0
    %1135 = vmatpush2.bf16.msra.mxu0 0
    %1136 = vmatprep.mubr.bf16.mxu0 0
    %1137 = vmatmul.mubr.bf16.gmra.mxu0 %v1099
    %v1138 = vpop.f32.mrf.mxu0
    %v1139 = vadd.f32 %v1096, %v1138
    %v1140 = vpop.f32.mrf.mxu0
    %v1141 = vpop.f32.mrf.mxu0
    %v1142 = vadd.f32 %v1096, %v1141
    %v1143 = vpop.f32.mrf.mxu0
    %1144 = vmatprep.mubr.bf16.mxu0 0
    %1145 = vmatmul.mubr.bf16.gmra.mxu0 %v1102
    %v1146 = vpop.f32.mrf.mxu0
    %v1147 = vadd.f32 %v1096, %v1146
    %v1148 = vpop.f32.mrf.mxu0
    %v1149 = vpop.f32.mrf.mxu0
    %v1150 = vpop.f32.mrf.mxu0
    %1151 = vdwg.mxu0
    %v1152 = vld [vmem:[%s2] sm:$0xff]
    %v1153 = vld [vmem:[%s2 + $0x8] sm:$0xff]
    %v1154 = vld [vmem:[%s2 + $0x10] sm:$0xff]
    %v1155 = vadd.f32 %v1139, %v1152
    %v1156 = vadd.f32 %v1142, %v1153
    %v1157 = vadd.f32 %v1147, %v1154
    %vm1158 = vcmask 15360
    %v1159 = vsel %vm1158, %v1155, -inf
    %1160 = vmax.xlane.f32.xlu0 %v1159
    %v1161 = vpop.xlane.xlu0 %1160
    %v1162 = vsel %vm1158, %v1156, -inf
    %1163 = vmax.xlane.f32.xlu0 %v1162
    %v1164 = vpop.xlane.xlu0 %1163
    %v1165 = vsel %vm1158, %v1157, -inf
    %1166 = vmax.xlane.f32.xlu0 %v1165
    %v1167 = vpop.xlane.xlu0 %1166
    %v1168 = vsub.f32 %v1155, %v1161
    %v1169 = vsub.f32 %v1156, %v1164
    %v1170 = vsub.f32 %v1157, %v1167
    %v1171 = vmul.f32 %v1168, 1.442695
    %v1172 = vpow.pop %v1171
    %v1173 = vmul.f32 %v1169, 1.442695
    %v1174 = vpow.pop %v1173
    %v1175 = vmul.f32 %v1170, 1.442695
    %v1176 = vpow.pop %v1175
    %v1177 = vsel %vm1158, %v1172, 0.0
    %1178 = vadd.xlane.f32.xlu0 %v1177
    %v1179 = vpop.xlane.xlu0 %1178
    %v1180 = vsel %vm1158, %v1174, 0.0
    %1181 = vadd.xlane.f32.xlu0 %v1180
    %v1182 = vpop.xlane.xlu0 %1181
    %v1183 = vsel %vm1158, %v1176, 0.0
    %1184 = vadd.xlane.f32.xlu0 %v1183
    %v1185 = vpop.xlane.xlu0 %1184
    %v1186 = vrcp.pop %v1179
    %v1187 = vmul.f32 %v1172, %v1186
    %v1188 = vrcp.pop %v1182
    %v1189 = vmul.f32 %v1174, %v1188
    %v1190 = vrcp.pop %v1185
    %v1191 = vmul.f32 %v1176, %v1190
    %v1192 = vld [vmem:[%s20] sm:$0xff]
    %v1193 = vld [vmem:[%s20 + $0x8] sm:$0xff]
    %v1194 = vld [vmem:[%s20 + $0x10] sm:$0xff]
    %v1195 = vld [vmem:[%s20 + $0x18] sm:$0xff]
    %v1196 = vpack.c.bf16 %v1193, %v1192
    %v1197 = vpack.c.bf16 %v1195, %v1194
    %v1198 = vsel %vm246, %v391, 0
    %1200 = vmatprep.subr.bf16.mxu0 0
    %1201 = vmatpush1.bf16.msra.mxu0 0
    %1202 = vmatprep.subr.bf16.mxu0 0
    %1203 = vmatpush1.bf16.msra.mxu0 0
    %1204 = vmatprep.subr.bf16.mxu0 0
    %1205 = vmatpush1.bf16.msra.mxu0 0
    %1206 = vmatprep.subr.bf16.mxu0 0
    %1207 = vmatpush1.bf16.msra.mxu0 0
    %1208 = vmatprep.subr.bf16.mxu0 0
    %1209 = vmatpush1.bf16.msra.mxu0 0
    %1210 = vmatprep.subr.bf16.mxu0 0
    %1211 = vmatpush1.bf16.msra.mxu0 0
    %1212 = vmatprep.subr.bf16.mxu0 0
    %1213 = vmatpush1.bf16.msra.mxu0 %v1197
    %1214 = vmatprep.subr.bf16.mxu0 0
    %1215 = vmatpush1.bf16.msra.mxu0 %v1196
    %1216 = vmatprep.subr.bf16.mxu0 0
    %1217 = vmatpush2.bf16.msra.mxu0 0
    %1218 = vmatprep.subr.bf16.mxu0 0
    %1219 = vmatpush2.bf16.msra.mxu0 0
    %1220 = vmatprep.subr.bf16.mxu0 0
    %1221 = vmatpush2.bf16.msra.mxu0 0
    %1222 = vmatprep.subr.bf16.mxu0 0
    %1223 = vmatpush2.bf16.msra.mxu0 0
    %1224 = vmatprep.subr.bf16.mxu0 0
    %1225 = vmatpush2.bf16.msra.mxu0 0
    %1226 = vmatprep.subr.bf16.mxu0 0
    %1227 = vmatpush2.bf16.msra.mxu0 0
    %1228 = vmatprep.subr.bf16.mxu0 0
    %1229 = vmatpush2.bf16.msra.mxu0 0
    %1230 = vmatprep.subr.bf16.mxu0 0
    %1231 = vmatpush2.bf16.msra.mxu0 0
    %1232 = vmatprep.mubr.bf16.mxu0 0
    %1233 = vmatmul.mubr.bf16.gmra.mxu0 %v1198
    %v1234 = vpop.f32.mrf.mxu0
    %v1235 = vadd.f32 0.0, %v1234
    %v1236 = vpop.f32.mrf.mxu0
    %v1237 = vpop.f32.mrf.mxu0
    %v1238 = vpop.f32.mrf.mxu0
    %1239 = vdwg.mxu0
    %v1240 = vld [vmem:[%s21] sm:$0xff]
    %v1241 = vld [vmem:[%s21 + $0x8] sm:$0xff]
    %v1242 = vld [vmem:[%s21 + $0x10] sm:$0xff]
    %v1243 = vld [vmem:[%s21 + $0x18] sm:$0xff]
    %v1244 = vpack.c.bf16 %v1241, %v1240
    %v1245 = vpack.c.bf16 %v1243, %v1242
    %1246 = vmatprep.subr.bf16.mxu0 0
    %1247 = vmatpush1.bf16.msra.mxu0 0
    %1248 = vmatprep.subr.bf16.mxu0 0
    %1249 = vmatpush1.bf16.msra.mxu0 0
    %1250 = vmatprep.subr.bf16.mxu0 0
    %1251 = vmatpush1.bf16.msra.mxu0 0
    %1252 = vmatprep.subr.bf16.mxu0 0
    %1253 = vmatpush1.bf16.msra.mxu0 0
    %1254 = vmatprep.subr.bf16.mxu0 0
    %1255 = vmatpush1.bf16.msra.mxu0 0
    %1256 = vmatprep.subr.bf16.mxu0 0
    %1257 = vmatpush1.bf16.msra.mxu0 0
    %1258 = vmatprep.subr.bf16.mxu0 0
    %1259 = vmatpush1.bf16.msra.mxu0 %v1245
    %1260 = vmatprep.subr.bf16.mxu0 0
    %1261 = vmatpush1.bf16.msra.mxu0 %v1244
    %1262 = vmatprep.subr.bf16.mxu0 0
    %1263 = vmatpush2.bf16.msra.mxu0 0
    %1264 = vmatprep.subr.bf16.mxu0 0
    %1265 = vmatpush2.bf16.msra.mxu0 0
    %1266 = vmatprep.subr.bf16.mxu0 0
    %1267 = vmatpush2.bf16.msra.mxu0 0
    %1268 = vmatprep.subr.bf16.mxu0 0
    %1269 = vmatpush2.bf16.msra.mxu0 0
    %1270 = vmatprep.subr.bf16.mxu0 0
    %1271 = vmatpush2.bf16.msra.mxu0 0
    %1272 = vmatprep.subr.bf16.mxu0 0
    %1273 = vmatpush2.bf16.msra.mxu0 0
    %1274 = vmatprep.subr.bf16.mxu0 0
    %1275 = vmatpush2.bf16.msra.mxu0 0
    %1276 = vmatprep.subr.bf16.mxu0 0
    %1277 = vmatpush2.bf16.msra.mxu0 0
    %1278 = vmatprep.mubr.bf16.mxu0 0
    %1279 = vmatmul.mubr.bf16.gmra.mxu0 %v1198
    %v1280 = vpop.f32.mrf.mxu0
    %v1281 = vadd.f32 0.0, %v1280
    %v1282 = vpop.f32.mrf.mxu0
    %v1283 = vpop.f32.mrf.mxu0
    %v1284 = vpop.f32.mrf.mxu0
    %1285 = vdwg.mxu0
    %v1286 = vmul.f32 %v1235, %v1281
    %v1287 = vsel %vm392, %v1286, 0.0
    %1288 = vadd.xlane.f32.xlu0 %v1287
    %v1289 = vpop.xlane.xlu0 %1288
    %v1290 = vmul.f32 %v1289, 0.35355338
    %v1291 = vmul.f32 %v1187, %v1290
    %v1292 = vmul.f32 %v1189, %v1290
    %v1293 = vmul.f32 %v1191, %v1290
    %v1294 = vmax.f32 %v1291, %v1292
    %v1295 = vmax.f32 %v1294, %v1293
    %v1296 = vsub.f32 %v1291, %v1295
    %v1297 = vmul.f32 %v1296, 1.442695
    %v1298 = vpow.pop %v1297
    %v1299 = vsub.f32 %v1292, %v1295
    %v1300 = vmul.f32 %v1299, 1.442695
    %v1301 = vpow.pop %v1300
    %v1302 = vsub.f32 %v1293, %v1295
    %v1303 = vmul.f32 %v1302, 1.442695
    %v1304 = vpow.pop %v1303
    %v1305 = vadd.f32 %v1298, %v1301
    %v1306 = vadd.f32 %v1305, %v1304
    %v1307 = vmul.f32 %v1187, %v1298
    %v1308 = vmul.f32 %v1189, %v1301
    %v1309 = vadd.f32 %v1307, %v1308
    %v1310 = vmul.f32 %v1191, %v1304
    %v1311 = vadd.f32 %v1309, %v1310
    %v1312 = vrcp.pop %v1306
    %v1313 = vmul.f32 %v1311, %v1312
    %1315 = vset.pattern.permute.xlu0 1
    %1316 = vperm.xlu0 %1315, %v1313
    %v1317 = vpop.permute.xlu0 %1316
    %v1319 = vmul.f32 %v1317, %v377
    %v1320 = vsel %vm246, %v380, %v1319
    %v1321 = vld [vmem:[%s22] sm:$0xff]
    %v1322 = vld [vmem:[%s22 + $0x8] sm:$0xff]
    %v1323 = vld [vmem:[%s22 + $0x10] sm:$0xff]
    %v1324 = vld [vmem:[%s22 + $0x18] sm:$0xff]
    %v1325 = vld [vmem:[%s22 + $0x20] sm:$0xff]
    %v1326 = vld [vmem:[%s22 + $0x28] sm:$0xff]
    %v1327 = vld [vmem:[%s22 + $0x30] sm:$0xff]
    %v1328 = vld [vmem:[%s22 + $0x38] sm:$0xff]
    %v1329 = vpack.c.bf16 %v1320, %v1320
    %v1330 = vpack.c.bf16 %v1322, %v1321
    %v1331 = vpack.c.bf16 %v1324, %v1323
    %v1332 = vpack.c.bf16 %v1326, %v1325
    %v1333 = vpack.c.bf16 %v1328, %v1327
    %v1334 = vld [vmem:[%s23] sm:$0x1]
    %v1336 = vlaneseq
    %v1337 = vshrl.u32 %v1336, 7
    %v1338 = vsub.s32 0, %v1337
    %v1339 = vrot.slane %v1334, %v1338
    %v1342 = vsel %vm487, %v1329, 0
    %1344 = vmatprep.subr.bf16.mxu0 0
    %1345 = vmatpush1.bf16.msra.mxu0 0
    %1346 = vmatprep.subr.bf16.mxu0 0
    %1347 = vmatpush1.bf16.msra.mxu0 0
    %1348 = vmatprep.subr.bf16.mxu0 0
    %1349 = vmatpush1.bf16.msra.mxu0 0
    %1350 = vmatprep.subr.bf16.mxu0 0
    %1351 = vmatpush1.bf16.msra.mxu0 0
    %1352 = vmatprep.subr.bf16.mxu0 0
    %1353 = vmatpush1.bf16.msra.mxu0 %v1333
    %1354 = vmatprep.subr.bf16.mxu0 0
    %1355 = vmatpush1.bf16.msra.mxu0 %v1332
    %1356 = vmatprep.subr.bf16.mxu0 0
    %1357 = vmatpush1.bf16.msra.mxu0 %v1331
    %1358 = vmatprep.subr.bf16.mxu0 0
    %1359 = vmatpush1.bf16.msra.mxu0 %v1330
    %1360 = vmatprep.subr.bf16.mxu0 0
    %1361 = vmatpush2.bf16.msra.mxu0 0
    %1362 = vmatprep.subr.bf16.mxu0 0
    %1363 = vmatpush2.bf16.msra.mxu0 0
    %1364 = vmatprep.subr.bf16.mxu0 0
    %1365 = vmatpush2.bf16.msra.mxu0 0
    %1366 = vmatprep.subr.bf16.mxu0 0
    %1367 = vmatpush2.bf16.msra.mxu0 0
    %1368 = vmatprep.subr.bf16.mxu0 0
    %1369 = vmatpush2.bf16.msra.mxu0 0
    %1370 = vmatprep.subr.bf16.mxu0 0
    %1371 = vmatpush2.bf16.msra.mxu0 0
    %1372 = vmatprep.subr.bf16.mxu0 0
    %1373 = vmatpush2.bf16.msra.mxu0 0
    %1374 = vmatprep.subr.bf16.mxu0 0
    %1375 = vmatpush2.bf16.msra.mxu0 0
    %1376 = vmatprep.mubr.bf16.mxu0 0
    %1377 = vmatmul.mubr.bf16.gmra.mxu0 %v1342
    %v1378 = vpop.f32.mrf.mxu0
    %v1379 = vadd.f32 %v1339, %v1378
    %v1380 = vpop.f32.mrf.mxu0
    %v1381 = vpop.f32.mrf.mxu0
    %v1382 = vpop.f32.mrf.mxu0
    %1383 = vdwg.mxu0
    %vm1384 = vcmask 48128
    %1385 = vst.msk [vmem:[#allocation16] sm:$0xff] %vm1384, %v1379
    // Predicated region
    $region130: #{tpu_custom_call.1} parent=1 // pred_check
      _
    $region131: #{tpu_custom_call.1} parent=1 // pred_check_branch
      %1387 = sbr.rel (0) target = $region133
    $region132: #{tpu_custom_call.1} parent=1 // pred_region
      %s1389 = ssub.s32 128, 128
      %1390 = vsyncadd [#allocation4], %s1389
      %s1392 = sshll.u32 [#allocation16], 4
      %s1393 = int_to_ptr.vmem [resolvable:$true] %s1392
      %1395 = dma.vmem_to_hbm [thread:$0]  %s1393, 128, %s24, [#allocation4]
    $region133: #{tpu_custom_call.1} parent=1 // pred_fallthru
      _
    // Predicated region
    $region134: #{tpu_custom_call.1} parent=1 // pred_check
      _
    $region135: #{tpu_custom_call.1} parent=1 // pred_check_branch
      %1397 = sbr.rel (0) target = $region137
    $region136: #{tpu_custom_call.1} parent=1 // pred_region
      %s1399 = ssub.s32 128, 128
      %1400 = vsyncadd [#allocation18], %s1399
      %s1402 = sshll.u32 [#allocation17], 4
      %s1403 = int_to_ptr.vmem [resolvable:$true] %s1402
      %1405 = dma.vmem_to_hbm [thread:$0]  %s1403, 128, %s25, [#allocation18]
    $region137: #{tpu_custom_call.1} parent=1 // pred_fallthru
      _
    // Predicated region
    $region138: #{tpu_custom_call.1} parent=1 // pred_check
      _
    $region139: #{tpu_custom_call.1} parent=1 // pred_check_branch
      %1407 = sbr.rel (0) target = $region141
    $region140: #{tpu_custom_call.1} parent=1 // pred_region
      %1408 = dma.done [#allocation4], 128
    $region141: #{tpu_custom_call.1} parent=1 // pred_fallthru
      _
    // Predicated region
    $region142: #{tpu_custom_call.1} parent=1 // pred_check
      _
    $region143: #{tpu_custom_call.1} parent=1 // pred_check_branch
      %1410 = sbr.rel (0) target = $region145
    $region144: #{tpu_custom_call.1} parent=1 // pred_region
      %1411 = dma.done [#allocation18], 128
    $region145: #{tpu_custom_call.1} parent=1 // pred_fallthru
      _
    %1412 = vsyncpa [#allocation3], 1
    %1413 = vsyncpa [#allocation6], 1
    %1414 = vsyncpa [#allocation9], 1
    %1415 = vsyncpa [#allocation12], 1
    %1416 = vsyncpa [#allocation15], 1
    %1417 = vsyncpa [#allocation4], 1
    %1418 = vsyncpa [#allocation18], 1

</llo_original>
